<compile_context>
chip_gen: v7x
topology: tpu7x:2x2x1
jax: 0.10.0
libtpu: 0.0.40
codegen_flags: <defaults>
</compile_context>

<pallas_src>
import functools
import math

import jax
import jax.numpy as jnp
from jax import lax
from jax.experimental import pallas as pl
from jax.experimental.pallas import tpu as pltpu


# ---------------------------------------------------------------------------
# Fused MHA kernel: one grid step per batch element.
# ---------------------------------------------------------------------------
def _mha_kernel(xq_ref, xk_ref, xv_ref, wqkv_ref, bqkv_ref, wo_ref, bo_ref,
                o_ref, *, h, d_k, mxu_dtype):
    # xq/xk/xv : (1, S, D) f32 activations
    # wqkv     : (3, D, D) mxu_dtype, x@W layout, wqkv[0] has 1/sqrt(d_k) folded in
    # bqkv     : (3, 1, D) f32 biases (bqkv[0] pre-scaled)
    # wo       : (D, D)    mxu_dtype, x@W layout
    # bo       : (1, D)    f32
    S, D = xq_ref.shape[1], xq_ref.shape[2]
    mx = lambda a: a.astype(mxu_dtype)          # MXU operand cast (no-op for f32)

    xq = xq_ref[0]                              # (S, D)
    xk = xk_ref[0]
    xv = xv_ref[0]

    # --- lane-dense (N=D) Q/K/V projections; scale already folded into wq/bq ---
    q = jnp.dot(mx(xq), wqkv_ref[0], preferred_element_type=jnp.float32) + bqkv_ref[0]
    k = jnp.dot(mx(xk), wqkv_ref[1], preferred_element_type=jnp.float32) + bqkv_ref[1]
    v = jnp.dot(mx(xv), wqkv_ref[2], preferred_element_type=jnp.float32) + bqkv_ref[2]

    # --- per-head attention, accumulated directly into the output projection ---
    # (no head concatenate: each head contributes ctx_h @ wo_t[head rows], which
    #  is a sublane-aligned weight slice and a lane-dense N=D accumulation)
    y = jnp.zeros((S, D), jnp.float32)
    for head in range(h):                       # static, unrolled (h is small)
        lo = head * d_k
        # NOTE: for production d_k in {64, 128} these lane slices are
        # tile-aligned; for tiny d_k a head-major / grid-over-heads layout
        # would avoid the masked vreg ops (see TODOs above).
        qh = q[:, lo:lo + d_k]                  # (S, d_k)
        kh = k[:, lo:lo + d_k]
        vh = v[:, lo:lo + d_k]

        # scores = qh @ kh.T via dot_general (contract d_k, no transpose op)
        s = lax.dot_general(mx(qh), mx(kh), (((1,), (1,)), ((), ())),
                            preferred_element_type=jnp.float32)      # (S, S)
        s = s - jnp.max(s, axis=-1, keepdims=True)
        p = jnp.exp(s)
        denom = jnp.sum(p, axis=-1, keepdims=True)
        r = pl.reciprocal(denom, approx=True)   # EUP slot (otherwise idle)
        r = r * (2.0 - denom * r)               # one Newton step -> ~f32 accuracy
        p = p * r

        ctx = jnp.dot(mx(p), mx(vh), preferred_element_type=jnp.float32)   # (S, d_k)
        y = y + jnp.dot(mx(ctx), wo_ref[pl.ds(lo, d_k), :],
                        preferred_element_type=jnp.float32)                # (S, D)

    # --- bias + single lane-dense store ---
    o_ref[0] = (y + bo_ref[...]).astype(o_ref.dtype)


def multi_headed_attention(packed, query, key, value, h, *, mxu_dtype=jnp.float32):
    """query/key/value: [B, S, D] -> [B, S, D]."""
    B, S, D = query.shape
    assert D % h == 0
    d_k = D // h
    wqkv, bqkv, wo_t, bo = packed               # (3,D,D), (3,1,D), (D,D), (1,D)

    kernel = functools.partial(_mha_kernel, h=h, d_k=d_k, mxu_dtype=mxu_dtype)
    return pl.pallas_call(
        kernel,
        out_shape=jax.ShapeDtypeStruct((B, S, D), query.dtype),
        grid_spec=pltpu.PrefetchScalarGridSpec(
            num_scalar_prefetch=0,
            grid=(B,),
            in_specs=[
                pl.BlockSpec((1, S, D), lambda b: (b, 0, 0)),
                pl.BlockSpec((1, S, D), lambda b: (b, 0, 0)),
                pl.BlockSpec((1, S, D), lambda b: (b, 0, 0)),
                pl.BlockSpec((3, D, D), lambda b: (0, 0, 0)),
                pl.BlockSpec((3, 1, D), lambda b: (0, 0, 0)),
                pl.BlockSpec((D, D), lambda b: (0, 0)),
                pl.BlockSpec((1, D), lambda b: (0, 0)),
            ],
            out_specs=pl.BlockSpec((1, S, D), lambda b: (b, 0, 0)),
        ),
        # NOTE: for realistic shapes, add vmem_limit_bytes=... here (per
        # generation) together with the flash tiling flagged in the TODOs.
        compiler_params=pltpu.CompilerParams(
            dimension_semantics=("parallel",)),
    )(query, key, value, wqkv, bqkv, wo_t, bo)


# ---------------------------------------------------------------------------
# Parameter handling
# ---------------------------------------------------------------------------
def init_params(rng, d_model):
    """Deterministic nn.Linear-style init (uniform +/- 1/sqrt(fan_in))."""
    bound = 1.0 / math.sqrt(d_model)
    keys = jax.random.split(rng, 8)
    u = lambda k, shape: jax.random.uniform(
        k, shape, jnp.float32, minval=-bound, maxval=bound)
    return {
        "wq": u(keys[0], (d_model, d_model)), "bq": u(keys[1], (d_model,)),
        "wk": u(keys[2], (d_model, d_model)), "bk": u(keys[3], (d_model,)),
        "wv": u(keys[4], (d_model, d_model)), "bv": u(keys[5], (d_model,)),
        "wo": u(keys[6], (d_model, d_model)), "bo": u(keys[7], (d_model,)),
    }


def pack_params(params, h, mxu_dtype=jnp.float32):
    """One-time repack: transpose to x@W layout, stack Q/K/V, fold the
    1/sqrt(d_k) scale into wq/bq, cast matmul weights to the MXU dtype."""
    D = params["wq"].shape[0]
    inv = 1.0 / math.sqrt(D // h)
    wqkv = jnp.stack([params["wq"].T * inv, params["wk"].T, params["wv"].T],
                     axis=0).astype(mxu_dtype)                      # (3,D,D)
    bqkv = jnp.stack([params["bq"] * inv, params["bk"], params["bv"]],
                     axis=0).reshape(3, 1, D).astype(jnp.float32)   # (3,1,D)
    wo_t = params["wo"].T.astype(mxu_dtype)                         # (D,D)
    bo = params["bo"].reshape(1, D).astype(jnp.float32)             # (1,D)
    return wqkv, bqkv, wo_t, bo


def reference_mha(params, query, key, value, h):
    """Plain-JAX f32 reference for correctness check."""
    B, S, D = query.shape
    dk = D // h
    lin = lambda x, w, b: x @ w.T + b
    q = lin(query, params["wq"], params["bq"]).reshape(B, S, h, dk).transpose(0, 2, 1, 3)
    k = lin(key, params["wk"], params["bk"]).reshape(B, S, h, dk).transpose(0, 2, 1, 3)
    v = lin(value, params["wv"], params["bv"]).reshape(B, S, h, dk).transpose(0, 2, 1, 3)
    s = jnp.einsum("bhqd,bhkd->bhqk", q, k) / math.sqrt(dk)
    p = jax.nn.softmax(s, axis=-1)
    x = jnp.einsum("bhqk,bhkd->bhqd", p, v)
    x = x.transpose(0, 2, 1, 3).reshape(B, S, D)
    return lin(x, params["wo"], params["bo"])


if __name__ == "__main__":
    batch = 2
    seq = 8           # max_code_length
    hidden = 32       # args.hidden
    heads = 4         # args.attn_heads

    rng = jax.random.PRNGKey(0)
    kq, kk, kv, kp = jax.random.split(rng, 4)
    query = jax.random.normal(kq, (batch, seq, hidden), jnp.float32)
    key = jax.random.normal(kk, (batch, seq, hidden), jnp.float32)
    value = jax.random.normal(kv, (batch, seq, hidden), jnp.float32)
    params = init_params(kp, hidden)
    ref = reference_mha(params, query, key, value, heads)

    # --- f32 MXU path: strict check against the f32 reference ---------------
    packed_f32 = pack_params(params, heads, mxu_dtype=jnp.float32)
    out_f32 = multi_headed_attention(packed_f32, query, key, value, heads,
                                     mxu_dtype=jnp.float32)
    out_f32 = jax.block_until_ready(out_f32)
    assert out_f32.shape == (batch, seq, hidden)
    assert jnp.allclose(out_f32, ref, atol=1e-4, rtol=1e-4), "f32 mismatch vs reference"

    # --- bf16 MXU path (production setting on v5e/v6e/v7x): looser tolerance --
    packed_bf16 = pack_params(params, heads, mxu_dtype=jnp.bfloat16)
    out_bf16 = multi_headed_attention(packed_bf16, query, key, value, heads,
                                      mxu_dtype=jnp.bfloat16)
    out_bf16 = jax.block_until_ready(out_bf16)
    assert out_bf16.shape == (batch, seq, hidden)
    assert jnp.allclose(out_bf16, ref, atol=5e-2, rtol=5e-2), "bf16 mismatch vs reference"

    print("KERNEL_OK")
</pallas_src>

<mosaic_0001>
module attributes {stable_mosaic.version = 11 : i64} {
  func.func @_mha_kernel(%arg0: i32, %arg1: memref<1x8x32xf32, #tpu.memory_space<vmem>>, %arg2: memref<1x8x32xf32, #tpu.memory_space<vmem>>, %arg3: memref<1x8x32xf32, #tpu.memory_space<vmem>>, %arg4: memref<3x32x32xf32, #tpu.memory_space<vmem>>, %arg5: memref<3x1x32xf32, #tpu.memory_space<vmem>>, %arg6: memref<32x32xf32, #tpu.memory_space<vmem>>, %arg7: memref<1x32xf32, #tpu.memory_space<vmem>>, %arg8: memref<1x8x32xf32, #tpu.memory_space<vmem>>) attributes {dimension_semantics = [#tpu.dimension_semantics<parallel>], iteration_bounds = array<i64: 2>, scalar_prefetch = 0 : i64, scratch_operands = 0 : i64, tpu.core_type = #tpu.core_type<tc>, window_params = [{transform_indices = @transform_0, window_bounds = array<i64: 1, 8, 32>}, {transform_indices = @transform_1, window_bounds = array<i64: 1, 8, 32>}, {transform_indices = @transform_2, window_bounds = array<i64: 1, 8, 32>}, {pipeline_mode = #tpu.pipeline_mode<synchronous>, transform_indices = @transform_3, window_bounds = array<i64: 3, 32, 32>}, {pipeline_mode = #tpu.pipeline_mode<synchronous>, transform_indices = @transform_4, window_bounds = array<i64: 3, 1, 32>}, {pipeline_mode = #tpu.pipeline_mode<synchronous>, transform_indices = @transform_5, window_bounds = array<i64: 32, 32>}, {pipeline_mode = #tpu.pipeline_mode<synchronous>, transform_indices = @transform_6, window_bounds = array<i64: 1, 32>}, {transform_indices = @transform_7, window_bounds = array<i64: 1, 8, 32>}]} {
    %c0 = arith.constant 0 : index
    %c0_0 = arith.constant 0 : index
    %c0_1 = arith.constant 0 : index
    %0 = vector.load %arg1[%c0, %c0_0, %c0_1] : memref<1x8x32xf32, #tpu.memory_space<vmem>>, vector<1x8x32xf32>
    %1 = vector.shape_cast %0 : vector<1x8x32xf32> to vector<8x32xf32>
    %c0_2 = arith.constant 0 : index
    %c0_3 = arith.constant 0 : index
    %c0_4 = arith.constant 0 : index
    %2 = vector.load %arg2[%c0_2, %c0_3, %c0_4] : memref<1x8x32xf32, #tpu.memory_space<vmem>>, vector<1x8x32xf32>
    %3 = vector.shape_cast %2 : vector<1x8x32xf32> to vector<8x32xf32>
    %c0_5 = arith.constant 0 : index
    %c0_6 = arith.constant 0 : index
    %c0_7 = arith.constant 0 : index
    %4 = vector.load %arg3[%c0_5, %c0_6, %c0_7] : memref<1x8x32xf32, #tpu.memory_space<vmem>>, vector<1x8x32xf32>
    %5 = vector.shape_cast %4 : vector<1x8x32xf32> to vector<8x32xf32>
    %c0_8 = arith.constant 0 : index
    %c0_9 = arith.constant 0 : index
    %c0_10 = arith.constant 0 : index
    %6 = vector.load %arg4[%c0_8, %c0_9, %c0_10] : memref<3x32x32xf32, #tpu.memory_space<vmem>>, vector<1x32x32xf32>
    %7 = vector.shape_cast %6 : vector<1x32x32xf32> to vector<32x32xf32>
    %cst = arith.constant dense<0.000000e+00> : vector<8x32xf32>
    %8 = tpu.matmul %1, %7, %cst {dimension_numbers = #tpu.dot_dimension_numbers<[1], [0], [0], [1], [0, 0, 1, 1], [], []>} : vector<8x32xf32>, vector<32x32xf32>, vector<8x32xf32> -> vector<8x32xf32>
    %c0_11 = arith.constant 0 : index
    %c0_12 = arith.constant 0 : index
    %c0_13 = arith.constant 0 : index
    %9 = vector.load %arg5[%c0_11, %c0_12, %c0_13] : memref<3x1x32xf32, #tpu.memory_space<vmem>>, vector<1x1x32xf32>
    %10 = vector.shape_cast %9 : vector<1x1x32xf32> to vector<1x32xf32>
    %11 = vector.broadcast %10 : vector<1x32xf32> to vector<8x32xf32>
    %12 = arith.addf %8, %11 : vector<8x32xf32>
    %c1 = arith.constant 1 : index
    %c0_14 = arith.constant 0 : index
    %c0_15 = arith.constant 0 : index
    %13 = vector.load %arg4[%c1, %c0_14, %c0_15] : memref<3x32x32xf32, #tpu.memory_space<vmem>>, vector<1x32x32xf32>
    %14 = vector.shape_cast %13 : vector<1x32x32xf32> to vector<32x32xf32>
    %cst_16 = arith.constant dense<0.000000e+00> : vector<8x32xf32>
    %15 = tpu.matmul %3, %14, %cst_16 {dimension_numbers = #tpu.dot_dimension_numbers<[1], [0], [0], [1], [0, 0, 1, 1], [], []>} : vector<8x32xf32>, vector<32x32xf32>, vector<8x32xf32> -> vector<8x32xf32>
    %c1_17 = arith.constant 1 : index
    %c0_18 = arith.constant 0 : index
    %c0_19 = arith.constant 0 : index
    %16 = vector.load %arg5[%c1_17, %c0_18, %c0_19] : memref<3x1x32xf32, #tpu.memory_space<vmem>>, vector<1x1x32xf32>
    %17 = vector.shape_cast %16 : vector<1x1x32xf32> to vector<1x32xf32>
    %18 = vector.broadcast %17 : vector<1x32xf32> to vector<8x32xf32>
    %19 = arith.addf %15, %18 : vector<8x32xf32>
    %c2 = arith.constant 2 : index
    %c0_20 = arith.constant 0 : index
    %c0_21 = arith.constant 0 : index
    %20 = vector.load %arg4[%c2, %c0_20, %c0_21] : memref<3x32x32xf32, #tpu.memory_space<vmem>>, vector<1x32x32xf32>
    %21 = vector.shape_cast %20 : vector<1x32x32xf32> to vector<32x32xf32>
    %cst_22 = arith.constant dense<0.000000e+00> : vector<8x32xf32>
    %22 = tpu.matmul %5, %21, %cst_22 {dimension_numbers = #tpu.dot_dimension_numbers<[1], [0], [0], [1], [0, 0, 1, 1], [], []>} : vector<8x32xf32>, vector<32x32xf32>, vector<8x32xf32> -> vector<8x32xf32>
    %c2_23 = arith.constant 2 : index
    %c0_24 = arith.constant 0 : index
    %c0_25 = arith.constant 0 : index
    %23 = vector.load %arg5[%c2_23, %c0_24, %c0_25] : memref<3x1x32xf32, #tpu.memory_space<vmem>>, vector<1x1x32xf32>
    %24 = vector.shape_cast %23 : vector<1x1x32xf32> to vector<1x32xf32>
    %25 = vector.broadcast %24 : vector<1x32xf32> to vector<8x32xf32>
    %26 = arith.addf %22, %25 : vector<8x32xf32>
    %cst_26 = arith.constant 0.000000e+00 : f32
    %27 = vector.broadcast %cst_26 : f32 to vector<8x32xf32>
    %28 = vector.extract_strided_slice %12 {offsets = [0, 0], sizes = [8, 8], strides = [1, 1]} : vector<8x32xf32> to vector<8x8xf32>
    %29 = vector.extract_strided_slice %19 {offsets = [0, 0], sizes = [8, 8], strides = [1, 1]} : vector<8x32xf32> to vector<8x8xf32>
    %30 = vector.extract_strided_slice %26 {offsets = [0, 0], sizes = [8, 8], strides = [1, 1]} : vector<8x32xf32> to vector<8x8xf32>
    %cst_27 = arith.constant dense<0.000000e+00> : vector<8x8xf32>
    %31 = tpu.matmul %28, %29, %cst_27 {dimension_numbers = #tpu.dot_dimension_numbers<[1], [1], [0], [0], [0, 0, 1, 0], [], []>} : vector<8x8xf32>, vector<8x8xf32>, vector<8x8xf32> -> vector<8x8xf32>
    %cst_28 = arith.constant dense<0xFF800000> : vector<8xf32>
    %32 = vector.multi_reduction <maximumf>, %31, %cst_28 [1] : vector<8x8xf32> to vector<8xf32>
    %33 = vector.shape_cast %32 : vector<8xf32> to vector<8x1xf32>
    %34 = vector.broadcast %33 : vector<8x1xf32> to vector<8x8xf32>
    %35 = arith.subf %31, %34 : vector<8x8xf32>
    %36 = math.exp %35 : vector<8x8xf32>
    %cst_29 = arith.constant dense<0.000000e+00> : vector<8xf32>
    %37 = vector.multi_reduction <add>, %36, %cst_29 [1] : vector<8x8xf32> to vector<8xf32>
    %38 = vector.shape_cast %37 : vector<8xf32> to vector<8x1xf32>
    %39 = tpu.reciprocal %38 {approx = true} : vector<8x1xf32> -> vector<8x1xf32>
    %40 = arith.mulf %38, %39 : vector<8x1xf32>
    %cst_30 = arith.constant 2.000000e+00 : f32
    %41 = vector.broadcast %cst_30 : f32 to vector<8x1xf32>
    %42 = arith.subf %41, %40 : vector<8x1xf32>
    %43 = arith.mulf %39, %42 : vector<8x1xf32>
    %44 = vector.broadcast %43 : vector<8x1xf32> to vector<8x8xf32>
    %45 = arith.mulf %36, %44 : vector<8x8xf32>
    %cst_31 = arith.constant dense<0.000000e+00> : vector<8x8xf32>
    %46 = tpu.matmul %45, %30, %cst_31 {dimension_numbers = #tpu.dot_dimension_numbers<[1], [0], [0], [1], [0, 0, 1, 1], [], []>} : vector<8x8xf32>, vector<8x8xf32>, vector<8x8xf32> -> vector<8x8xf32>
    %c0_32 = arith.constant 0 : index
    %c0_33 = arith.constant 0 : index
    %47 = vector.load %arg6[%c0_32, %c0_33] : memref<32x32xf32, #tpu.memory_space<vmem>>, vector<8x32xf32>
    %cst_34 = arith.constant dense<0.000000e+00> : vector<8x32xf32>
    %48 = tpu.matmul %46, %47, %cst_34 {dimension_numbers = #tpu.dot_dimension_numbers<[1], [0], [0], [1], [0, 0, 1, 1], [], []>} : vector<8x8xf32>, vector<8x32xf32>, vector<8x32xf32> -> vector<8x32xf32>
    %49 = arith.addf %27, %48 : vector<8x32xf32>
    %50 = vector.extract_strided_slice %12 {offsets = [0, 8], sizes = [8, 8], strides = [1, 1]} : vector<8x32xf32> to vector<8x8xf32>
    %51 = vector.extract_strided_slice %19 {offsets = [0, 8], sizes = [8, 8], strides = [1, 1]} : vector<8x32xf32> to vector<8x8xf32>
    %52 = vector.extract_strided_slice %26 {offsets = [0, 8], sizes = [8, 8], strides = [1, 1]} : vector<8x32xf32> to vector<8x8xf32>
    %cst_35 = arith.constant dense<0.000000e+00> : vector<8x8xf32>
    %53 = tpu.matmul %50, %51, %cst_35 {dimension_numbers = #tpu.dot_dimension_numbers<[1], [1], [0], [0], [0, 0, 1, 0], [], []>} : vector<8x8xf32>, vector<8x8xf32>, vector<8x8xf32> -> vector<8x8xf32>
    %cst_36 = arith.constant dense<0xFF800000> : vector<8xf32>
    %54 = vector.multi_reduction <maximumf>, %53, %cst_36 [1] : vector<8x8xf32> to vector<8xf32>
    %55 = vector.shape_cast %54 : vector<8xf32> to vector<8x1xf32>
    %56 = vector.broadcast %55 : vector<8x1xf32> to vector<8x8xf32>
    %57 = arith.subf %53, %56 : vector<8x8xf32>
    %58 = math.exp %57 : vector<8x8xf32>
    %cst_37 = arith.constant dense<0.000000e+00> : vector<8xf32>
    %59 = vector.multi_reduction <add>, %58, %cst_37 [1] : vector<8x8xf32> to vector<8xf32>
    %60 = vector.shape_cast %59 : vector<8xf32> to vector<8x1xf32>
    %61 = tpu.reciprocal %60 {approx = true} : vector<8x1xf32> -> vector<8x1xf32>
    %62 = arith.mulf %60, %61 : vector<8x1xf32>
    %cst_38 = arith.constant 2.000000e+00 : f32
    %63 = vector.broadcast %cst_38 : f32 to vector<8x1xf32>
    %64 = arith.subf %63, %62 : vector<8x1xf32>
    %65 = arith.mulf %61, %64 : vector<8x1xf32>
    %66 = vector.broadcast %65 : vector<8x1xf32> to vector<8x8xf32>
    %67 = arith.mulf %58, %66 : vector<8x8xf32>
    %cst_39 = arith.constant dense<0.000000e+00> : vector<8x8xf32>
    %68 = tpu.matmul %67, %52, %cst_39 {dimension_numbers = #tpu.dot_dimension_numbers<[1], [0], [0], [1], [0, 0, 1, 1], [], []>} : vector<8x8xf32>, vector<8x8xf32>, vector<8x8xf32> -> vector<8x8xf32>
    %c8 = arith.constant 8 : index
    %c0_40 = arith.constant 0 : index
    %69 = vector.load %arg6[%c8, %c0_40] : memref<32x32xf32, #tpu.memory_space<vmem>>, vector<8x32xf32>
    %cst_41 = arith.constant dense<0.000000e+00> : vector<8x32xf32>
    %70 = tpu.matmul %68, %69, %cst_41 {dimension_numbers = #tpu.dot_dimension_numbers<[1], [0], [0], [1], [0, 0, 1, 1], [], []>} : vector<8x8xf32>, vector<8x32xf32>, vector<8x32xf32> -> vector<8x32xf32>
    %71 = arith.addf %49, %70 : vector<8x32xf32>
    %72 = vector.extract_strided_slice %12 {offsets = [0, 16], sizes = [8, 8], strides = [1, 1]} : vector<8x32xf32> to vector<8x8xf32>
    %73 = vector.extract_strided_slice %19 {offsets = [0, 16], sizes = [8, 8], strides = [1, 1]} : vector<8x32xf32> to vector<8x8xf32>
    %74 = vector.extract_strided_slice %26 {offsets = [0, 16], sizes = [8, 8], strides = [1, 1]} : vector<8x32xf32> to vector<8x8xf32>
    %cst_42 = arith.constant dense<0.000000e+00> : vector<8x8xf32>
    %75 = tpu.matmul %72, %73, %cst_42 {dimension_numbers = #tpu.dot_dimension_numbers<[1], [1], [0], [0], [0, 0, 1, 0], [], []>} : vector<8x8xf32>, vector<8x8xf32>, vector<8x8xf32> -> vector<8x8xf32>
    %cst_43 = arith.constant dense<0xFF800000> : vector<8xf32>
    %76 = vector.multi_reduction <maximumf>, %75, %cst_43 [1] : vector<8x8xf32> to vector<8xf32>
    %77 = vector.shape_cast %76 : vector<8xf32> to vector<8x1xf32>
    %78 = vector.broadcast %77 : vector<8x1xf32> to vector<8x8xf32>
    %79 = arith.subf %75, %78 : vector<8x8xf32>
    %80 = math.exp %79 : vector<8x8xf32>
    %cst_44 = arith.constant dense<0.000000e+00> : vector<8xf32>
    %81 = vector.multi_reduction <add>, %80, %cst_44 [1] : vector<8x8xf32> to vector<8xf32>
    %82 = vector.shape_cast %81 : vector<8xf32> to vector<8x1xf32>
    %83 = tpu.reciprocal %82 {approx = true} : vector<8x1xf32> -> vector<8x1xf32>
    %84 = arith.mulf %82, %83 : vector<8x1xf32>
    %cst_45 = arith.constant 2.000000e+00 : f32
    %85 = vector.broadcast %cst_45 : f32 to vector<8x1xf32>
    %86 = arith.subf %85, %84 : vector<8x1xf32>
    %87 = arith.mulf %83, %86 : vector<8x1xf32>
    %88 = vector.broadcast %87 : vector<8x1xf32> to vector<8x8xf32>
    %89 = arith.mulf %80, %88 : vector<8x8xf32>
    %cst_46 = arith.constant dense<0.000000e+00> : vector<8x8xf32>
    %90 = tpu.matmul %89, %74, %cst_46 {dimension_numbers = #tpu.dot_dimension_numbers<[1], [0], [0], [1], [0, 0, 1, 1], [], []>} : vector<8x8xf32>, vector<8x8xf32>, vector<8x8xf32> -> vector<8x8xf32>
    %c16 = arith.constant 16 : index
    %c0_47 = arith.constant 0 : index
    %91 = vector.load %arg6[%c16, %c0_47] : memref<32x32xf32, #tpu.memory_space<vmem>>, vector<8x32xf32>
    %cst_48 = arith.constant dense<0.000000e+00> : vector<8x32xf32>
    %92 = tpu.matmul %90, %91, %cst_48 {dimension_numbers = #tpu.dot_dimension_numbers<[1], [0], [0], [1], [0, 0, 1, 1], [], []>} : vector<8x8xf32>, vector<8x32xf32>, vector<8x32xf32> -> vector<8x32xf32>
    %93 = arith.addf %71, %92 : vector<8x32xf32>
    %94 = vector.extract_strided_slice %12 {offsets = [0, 24], sizes = [8, 8], strides = [1, 1]} : vector<8x32xf32> to vector<8x8xf32>
    %95 = vector.extract_strided_slice %19 {offsets = [0, 24], sizes = [8, 8], strides = [1, 1]} : vector<8x32xf32> to vector<8x8xf32>
    %96 = vector.extract_strided_slice %26 {offsets = [0, 24], sizes = [8, 8], strides = [1, 1]} : vector<8x32xf32> to vector<8x8xf32>
    %cst_49 = arith.constant dense<0.000000e+00> : vector<8x8xf32>
    %97 = tpu.matmul %94, %95, %cst_49 {dimension_numbers = #tpu.dot_dimension_numbers<[1], [1], [0], [0], [0, 0, 1, 0], [], []>} : vector<8x8xf32>, vector<8x8xf32>, vector<8x8xf32> -> vector<8x8xf32>
    %cst_50 = arith.constant dense<0xFF800000> : vector<8xf32>
    %98 = vector.multi_reduction <maximumf>, %97, %cst_50 [1] : vector<8x8xf32> to vector<8xf32>
    %99 = vector.shape_cast %98 : vector<8xf32> to vector<8x1xf32>
    %100 = vector.broadcast %99 : vector<8x1xf32> to vector<8x8xf32>
    %101 = arith.subf %97, %100 : vector<8x8xf32>
    %102 = math.exp %101 : vector<8x8xf32>
    %cst_51 = arith.constant dense<0.000000e+00> : vector<8xf32>
    %103 = vector.multi_reduction <add>, %102, %cst_51 [1] : vector<8x8xf32> to vector<8xf32>
    %104 = vector.shape_cast %103 : vector<8xf32> to vector<8x1xf32>
    %105 = tpu.reciprocal %104 {approx = true} : vector<8x1xf32> -> vector<8x1xf32>
    %106 = arith.mulf %104, %105 : vector<8x1xf32>
    %cst_52 = arith.constant 2.000000e+00 : f32
    %107 = vector.broadcast %cst_52 : f32 to vector<8x1xf32>
    %108 = arith.subf %107, %106 : vector<8x1xf32>
    %109 = arith.mulf %105, %108 : vector<8x1xf32>
    %110 = vector.broadcast %109 : vector<8x1xf32> to vector<8x8xf32>
    %111 = arith.mulf %102, %110 : vector<8x8xf32>
    %cst_53 = arith.constant dense<0.000000e+00> : vector<8x8xf32>
    %112 = tpu.matmul %111, %96, %cst_53 {dimension_numbers = #tpu.dot_dimension_numbers<[1], [0], [0], [1], [0, 0, 1, 1], [], []>} : vector<8x8xf32>, vector<8x8xf32>, vector<8x8xf32> -> vector<8x8xf32>
    %c24 = arith.constant 24 : index
    %c0_54 = arith.constant 0 : index
    %113 = vector.load %arg6[%c24, %c0_54] : memref<32x32xf32, #tpu.memory_space<vmem>>, vector<8x32xf32>
    %cst_55 = arith.constant dense<0.000000e+00> : vector<8x32xf32>
    %114 = tpu.matmul %112, %113, %cst_55 {dimension_numbers = #tpu.dot_dimension_numbers<[1], [0], [0], [1], [0, 0, 1, 1], [], []>} : vector<8x8xf32>, vector<8x32xf32>, vector<8x32xf32> -> vector<8x32xf32>
    %115 = arith.addf %93, %114 : vector<8x32xf32>
    %c0_56 = arith.constant 0 : index
    %c0_57 = arith.constant 0 : index
    %116 = vector.load %arg7[%c0_56, %c0_57] : memref<1x32xf32, #tpu.memory_space<vmem>>, vector<1x32xf32>
    %117 = vector.broadcast %116 : vector<1x32xf32> to vector<8x32xf32>
    %118 = arith.addf %115, %117 : vector<8x32xf32>
    %c0_58 = arith.constant 0 : index
    %c0_59 = arith.constant 0 : index
    %c0_60 = arith.constant 0 : index
    %119 = vector.load %arg8[%c0_58, %c0_59, %c0_60] : memref<1x8x32xf32, #tpu.memory_space<vmem>>, vector<1x8x32xf32>
    %120 = vector.shape_cast %119 : vector<1x8x32xf32> to vector<8x32xf32>
    %121 = vector.shape_cast %118 : vector<8x32xf32> to vector<1x8x32xf32>
    tpu.vector_store %arg8[%c0_58, %c0_59, %c0_60], %121 {strides = array<i32>} : memref<1x8x32xf32, #tpu.memory_space<vmem>>, vector<1x8x32xf32>,
    return
  }
  func.func @transform_0(%arg0: i32) -> (i32, i32, i32) {
    %c0_i32 = arith.constant 0 : i32
    %c0_i32_0 = arith.constant 0 : i32
    %c0_i32_1 = arith.constant 0 : i32
    return %arg0, %c0_i32, %c0_i32_0 : i32, i32, i32
  }
  func.func @transform_1(%arg0: i32) -> (i32, i32, i32) {
    %c0_i32 = arith.constant 0 : i32
    %c0_i32_0 = arith.constant 0 : i32
    %c0_i32_1 = arith.constant 0 : i32
    return %arg0, %c0_i32, %c0_i32_0 : i32, i32, i32
  }
  func.func @transform_2(%arg0: i32) -> (i32, i32, i32) {
    %c0_i32 = arith.constant 0 : i32
    %c0_i32_0 = arith.constant 0 : i32
    %c0_i32_1 = arith.constant 0 : i32
    return %arg0, %c0_i32, %c0_i32_0 : i32, i32, i32
  }
  func.func @transform_3(%arg0: i32) -> (i32, i32, i32) {
    %c0_i32 = arith.constant 0 : i32
    %c0_i32_0 = arith.constant 0 : i32
    %c0_i32_1 = arith.constant 0 : i32
    %c0_i32_2 = arith.constant 0 : i32
    return %c0_i32, %c0_i32_0, %c0_i32_1 : i32, i32, i32
  }
  func.func @transform_4(%arg0: i32) -> (i32, i32, i32) {
    %c0_i32 = arith.constant 0 : i32
    %c0_i32_0 = arith.constant 0 : i32
    %c0_i32_1 = arith.constant 0 : i32
    %c0_i32_2 = arith.constant 0 : i32
    return %c0_i32, %c0_i32_0, %c0_i32_1 : i32, i32, i32
  }
  func.func @transform_5(%arg0: i32) -> (i32, i32) {
    %c0_i32 = arith.constant 0 : i32
    %c0_i32_0 = arith.constant 0 : i32
    %c0_i32_1 = arith.constant 0 : i32
    return %c0_i32, %c0_i32_0 : i32, i32
  }
  func.func @transform_6(%arg0: i32) -> (i32, i32) {
    %c0_i32 = arith.constant 0 : i32
    %c0_i32_0 = arith.constant 0 : i32
    %c0_i32_1 = arith.constant 0 : i32
    return %c0_i32, %c0_i32_0 : i32, i32
  }
  func.func @transform_7(%arg0: i32) -> (i32, i32, i32) {
    %c0_i32 = arith.constant 0 : i32
    %c0_i32_0 = arith.constant 0 : i32
    %c0_i32_1 = arith.constant 0 : i32
    return %arg0, %c0_i32, %c0_i32_0 : i32, i32, i32
  }
}

</mosaic_0001>

<llo_original>
// kernel: tpu_custom_call.1
$region0: #{tpu_custom_call.1}
  #allocation0 [shape = 'u32[]', space=smem, size = 0x4, offset = 0x4, fixed_abs, tag = 'smem constant byte address 0x4 - core index']
  #allocation1 [shape = 'u32[144,128]{1,0:T(1,128)}', space=vmem, size = 0x12000, scoped, tag = 'internal scratch']
  %s0 = inlined_call_operand.hbm [shape: f32[2,8,32], index: 0, kind: input, shape index: {}]
  %s1 = inlined_call_operand.hbm [shape: f32[2,8,32], index: 1, kind: input, shape index: {}]
  %s2 = inlined_call_operand.hbm [shape: f32[2,8,32], index: 2, kind: input, shape index: {}]
  %s3 = inlined_call_operand.hbm [shape: f32[3,32,32], index: 3, kind: input, shape index: {}]
  %s4 = inlined_call_operand.vmem [shape: f32[3,1,32], index: 4, kind: input, shape index: {}]
  %s5 = inlined_call_operand.hbm [shape: f32[32,32], index: 5, kind: input, shape index: {}]
  %s6 = inlined_call_operand.vmem [shape: f32[1,32], index: 6, kind: input, shape index: {}]
  %s7 = inlined_call_operand.hbm [shape: f32[2,8,32], index: 7, kind: output, shape index: {}]
  %s8 = sld [smem:[#allocation0]]
  $region81: #{tpu_custom_call.1} parent=0
    _
  %s10 = ssub.s32 1, %s8
  %s11 = scalar_select 0, %s10, %s8
  $region1: #{tpu_custom_call.1} parent=0
    #allocation2 [shape = 'u8[8192]{0}', space=vmem, size = 0x2000, scoped, tag = 'input window, operand 0']
    #allocation3 [shape = 's32[2]{0}', space=sflag, size = 0x8, scoped, tag = 'scoped memory for tpu_custom_call.1']
    #allocation4 [shape = 's32[2]{0}', space=sflag, size = 0x8, scoped, tag = 'scoped memory for tpu_custom_call.1']
    #allocation5 [shape = 'u8[8192]{0}', space=vmem, size = 0x2000, scoped, tag = 'input window, operand 1']
    #allocation6 [shape = 's32[2]{0}', space=sflag, size = 0x8, scoped, tag = 'scoped memory for tpu_custom_call.1']
    #allocation7 [shape = 'u8[8192]{0}', space=vmem, size = 0x2000, scoped, tag = 'input window, operand 2']
    #allocation8 [shape = 'u8[49152]{0}', space=vmem, size = 0xc000, scoped, tag = 'input window, operand 3, single buffered']
    #allocation9 [shape = 's32[1]{0}', space=sflag, size = 0x4, scoped, tag = 'scoped memory for tpu_custom_call.1']
    #allocation10 [shape = 'u8[16384]{0}', space=vmem, size = 0x4000, scoped, tag = 'input window, operand 5, single buffered']
    #allocation11 [shape = 'u8[8192]{0}', space=vmem, size = 0x2000, scoped, tag = 'output window, operand 0']
    %12 = vsyncpa [#allocation3], 0
    %s13 = scalar_lea.sflag [#allocation3], 1
    %14 = vsyncpa %s13, 0
    %15 = vsyncpa [#allocation6], 0
    %s16 = scalar_lea.sflag [#allocation6], 1
    %17 = vsyncpa %s16, 0
    %18 = vsyncpa [#allocation9], 0
    %19 = vsyncpa [#allocation4], 0
    %s20 = scalar_lea.sflag [#allocation4], 1
    %21 = vsyncpa %s20, 0
    loop: start=0, step=1, limit=4
    $region2: #{tpu_custom_call.1} parent=1 // loop_pre_header
      _
    $region3: #{tpu_custom_call.1} parent=1 // loop_header
      %s23 = sphi 0, %s27
      %p24 = scmp.ge.s32.totalorder %s23, 4
      %s33 = sphi 0, %s35
      %s36 = sphi 0, %s33
      %s37 = sphi 0, %s36
      %s53 = sphi 0, %s37
      %s59 = sphi 0, %s61
      %s62 = sphi 0, %s59
      %s63 = sphi 0, %s62
      %s79 = sphi 0, %s63
      %s85 = sphi 0, %s87
      %s88 = sphi 0, %s85
      %s89 = sphi 0, %s88
      %s105 = sphi 0, %s89
      %s109 = sphi 0, %s109
      %s111 = sphi 0, %s109
      %s112 = sphi 0, %s111
      %s126 = sphi 0, %s112
      %s130 = sphi 0, %s130
      %s132 = sphi 0, %s130
      %s133 = sphi 0, %s132
      %s147 = sphi 0, %s133
      %s151 = sphi 0, %s151
      %s153 = sphi 0, %s151
      %s154 = sphi 0, %s153
      %s168 = sphi 0, %s154
      %s172 = sphi 0, %s172
      %s174 = sphi 0, %s172
      %s175 = sphi 0, %s174
      %s189 = sphi 0, %s175
      %s195 = sphi 0, %s197
      %s198 = sphi 0, %s195
      %s199 = sphi 0, %s198
      %s215 = sphi 0, %s199
    $region4: #{tpu_custom_call.1} parent=1 // loop_header_branch
      %26 = sbr.rel (%p24) target = $region8
    $region5: #{tpu_custom_call.1} parent=1 // loop_body
      %s28 = ssub.s32 %s23, 1
      %s29 = ssub.s32 %s23, 2
      %s30 = sadd.s32 %s23, 1
      %s31 = ssub.s32 %s23, %s30
      %p32 = scmp.eq.s32.totalorder %s31, 0
      %s34 = sadd.s32 %s33, 1
      %s35 = scalar_select %p32, %s33, %s34
      %p38 = pneg %p32
      %p39 = scmp.eq.s32.totalorder %s23, 1
      %p40 = por %p38, %p39
      %p41 = scmp.ne.s32.totalorder %s33, %s36
      %p42 = scmp.eq.s32.totalorder %s23, 0
      %p43 = por %p41, %p42
      %p44 = scmp.ne.s32.totalorder %s33, %s36
      %p45 = scmp.eq.s32.totalorder %s28, 1
      %p46 = por %p44, %p45
      %p47 = scmp.ne.s32.totalorder %s36, %s37
      %p48 = scmp.eq.s32.totalorder %s28, 0
      %p49 = por %p47, %p48
      %p50 = scmp.ne.s32.totalorder %s36, %s37
      %p51 = scmp.eq.s32.totalorder %s29, 1
      %p52 = por %p50, %p51
      %p54 = scmp.ne.s32.totalorder %s37, %s53
      %p55 = scmp.eq.s32.totalorder %s29, 0
      %p56 = por %p54, %p55
      %s57 = ssub.s32 %s23, %s30
      %p58 = scmp.eq.s32.totalorder %s57, 0
      %s60 = sadd.s32 %s59, 1
      %s61 = scalar_select %p58, %s59, %s60
      %p64 = pneg %p58
      %p65 = scmp.eq.s32.totalorder %s23, 1
      %p66 = por %p64, %p65
      %p67 = scmp.ne.s32.totalorder %s59, %s62
      %p68 = scmp.eq.s32.totalorder %s23, 0
      %p69 = por %p67, %p68
      %p70 = scmp.ne.s32.totalorder %s59, %s62
      %p71 = scmp.eq.s32.totalorder %s28, 1
      %p72 = por %p70, %p71
      %p73 = scmp.ne.s32.totalorder %s62, %s63
      %p74 = scmp.eq.s32.totalorder %s28, 0
      %p75 = por %p73, %p74
      %p76 = scmp.ne.s32.totalorder %s62, %s63
      %p77 = scmp.eq.s32.totalorder %s29, 1
      %p78 = por %p76, %p77
      %p80 = scmp.ne.s32.totalorder %s63, %s79
      %p81 = scmp.eq.s32.totalorder %s29, 0
      %p82 = por %p80, %p81
      %s83 = ssub.s32 %s23, %s30
      %p84 = scmp.eq.s32.totalorder %s83, 0
      %s86 = sadd.s32 %s85, 1
      %s87 = scalar_select %p84, %s85, %s86
      %p90 = pneg %p84
      %p91 = scmp.eq.s32.totalorder %s23, 1
      %p92 = por %p90, %p91
      %p93 = scmp.ne.s32.totalorder %s85, %s88
      %p94 = scmp.eq.s32.totalorder %s23, 0
      %p95 = por %p93, %p94
      %p96 = scmp.ne.s32.totalorder %s85, %s88
      %p97 = scmp.eq.s32.totalorder %s28, 1
      %p98 = por %p96, %p97
      %p99 = scmp.ne.s32.totalorder %s88, %s89
      %p100 = scmp.eq.s32.totalorder %s28, 0
      %p101 = por %p99, %p100
      %p102 = scmp.ne.s32.totalorder %s88, %s89
      %p103 = scmp.eq.s32.totalorder %s29, 1
      %p104 = por %p102, %p103
      %p106 = scmp.ne.s32.totalorder %s89, %s105
      %p107 = scmp.eq.s32.totalorder %s29, 0
      %p108 = por %p106, %p107
      %s110 = sadd.s32 %s109, 1
      %p113 = scmp.eq.s32.totalorder %s23, 1
      %p114 = scmp.ne.s32.totalorder %s109, %s111
      %p115 = scmp.eq.s32.totalorder %s23, 0
      %p116 = por %p114, %p115
      %p117 = scmp.ne.s32.totalorder %s109, %s111
      %p118 = scmp.eq.s32.totalorder %s28, 1
      %p119 = por %p117, %p118
      %p120 = scmp.ne.s32.totalorder %s111, %s112
      %p121 = scmp.eq.s32.totalorder %s28, 0
      %p122 = por %p120, %p121
      %p123 = scmp.ne.s32.totalorder %s111, %s112
      %p124 = scmp.eq.s32.totalorder %s29, 1
      %p125 = por %p123, %p124
      %p127 = scmp.ne.s32.totalorder %s112, %s126
      %p128 = scmp.eq.s32.totalorder %s29, 0
      %p129 = por %p127, %p128
      %s131 = sadd.s32 %s130, 1
      %p134 = scmp.eq.s32.totalorder %s23, 1
      %p135 = scmp.ne.s32.totalorder %s130, %s132
      %p136 = scmp.eq.s32.totalorder %s23, 0
      %p137 = por %p135, %p136
      %p138 = scmp.ne.s32.totalorder %s130, %s132
      %p139 = scmp.eq.s32.totalorder %s28, 1
      %p140 = por %p138, %p139
      %p141 = scmp.ne.s32.totalorder %s132, %s133
      %p142 = scmp.eq.s32.totalorder %s28, 0
      %p143 = por %p141, %p142
      %p144 = scmp.ne.s32.totalorder %s132, %s133
      %p145 = scmp.eq.s32.totalorder %s29, 1
      %p146 = por %p144, %p145
      %p148 = scmp.ne.s32.totalorder %s133, %s147
      %p149 = scmp.eq.s32.totalorder %s29, 0
      %p150 = por %p148, %p149
      %s152 = sadd.s32 %s151, 1
      %p155 = scmp.eq.s32.totalorder %s23, 1
      %p156 = scmp.ne.s32.totalorder %s151, %s153
      %p157 = scmp.eq.s32.totalorder %s23, 0
      %p158 = por %p156, %p157
      %p159 = scmp.ne.s32.totalorder %s151, %s153
      %p160 = scmp.eq.s32.totalorder %s28, 1
      %p161 = por %p159, %p160
      %p162 = scmp.ne.s32.totalorder %s153, %s154
      %p163 = scmp.eq.s32.totalorder %s28, 0
      %p164 = por %p162, %p163
      %p165 = scmp.ne.s32.totalorder %s153, %s154
      %p166 = scmp.eq.s32.totalorder %s29, 1
      %p167 = por %p165, %p166
      %p169 = scmp.ne.s32.totalorder %s154, %s168
      %p170 = scmp.eq.s32.totalorder %s29, 0
      %p171 = por %p169, %p170
      %s173 = sadd.s32 %s172, 1
      %p176 = scmp.eq.s32.totalorder %s23, 1
      %p177 = scmp.ne.s32.totalorder %s172, %s174
      %p178 = scmp.eq.s32.totalorder %s23, 0
      %p179 = por %p177, %p178
      %p180 = scmp.ne.s32.totalorder %s172, %s174
      %p181 = scmp.eq.s32.totalorder %s28, 1
      %p182 = por %p180, %p181
      %p183 = scmp.ne.s32.totalorder %s174, %s175
      %p184 = scmp.eq.s32.totalorder %s28, 0
      %p185 = por %p183, %p184
      %p186 = scmp.ne.s32.totalorder %s174, %s175
      %p187 = scmp.eq.s32.totalorder %s29, 1
      %p188 = por %p186, %p187
      %p190 = scmp.ne.s32.totalorder %s175, %s189
      %p191 = scmp.eq.s32.totalorder %s29, 0
      %p192 = por %p190, %p191
      %s193 = ssub.s32 %s23, %s30
      %p194 = scmp.eq.s32.totalorder %s193, 0
      %s196 = sadd.s32 %s195, 1
      %s197 = scalar_select %p194, %s195, %s196
      %p200 = pneg %p194
      %p201 = scmp.eq.s32.totalorder %s23, 1
      %p202 = por %p200, %p201
      %p203 = scmp.ne.s32.totalorder %s195, %s198
      %p204 = scmp.eq.s32.totalorder %s23, 0
      %p205 = por %p203, %p204
      %p206 = scmp.ne.s32.totalorder %s195, %s198
      %p207 = scmp.eq.s32.totalorder %s28, 1
      %p208 = por %p206, %p207
      %p209 = scmp.ne.s32.totalorder %s198, %s199
      %p210 = scmp.eq.s32.totalorder %s28, 0
      %p211 = por %p209, %p210
      %p212 = scmp.ne.s32.totalorder %s198, %s199
      %p213 = scmp.eq.s32.totalorder %s29, 1
      %p214 = por %p212, %p213
      %p216 = scmp.ne.s32.totalorder %s199, %s215
      %p217 = scmp.eq.s32.totalorder %s29, 0
      %p218 = por %p216, %p217
      %p219 = scmp.le.s32.totalorder 1, %s23
      %p220 = scmp.lt.s32.totalorder %s23, 3
      %p221 = pnand %p219, %p220
      %p222 = pneg %p221
      // Predicated region
      $region9: #{tpu_custom_call.1} parent=5 // pred_check
        _
      $region10: #{tpu_custom_call.1} parent=5 // pred_check_branch
        %224 = sbr.rel (%p221) target = $region12
      $region11: #{tpu_custom_call.1} parent=5 // pred_region
        %s225 = ssub.s32 %s23, 1
        // Predicated region
        $region13: #{tpu_custom_call.1} parent=11 // pred_check
          %p226 = pneg %p122
        $region14: #{tpu_custom_call.1} parent=11 // pred_check_branch
          %228 = sbr.rel (%p226) target = $region16
        $region15: #{tpu_custom_call.1} parent=11 // pred_region
          %s230 = ssub.s32 1536, 1536
          %231 = vsyncadd [#allocation9], %s230
          %s232 = sshll.u32 [#allocation8], 4
          %s233 = int_to_ptr.vmem [resolvable:$true] %s232
          %238 = dma.hbm_to_vmem [thread:$0]  %s3, 1536, %s233, [#allocation9], 128, 128, 8
        $region16: #{tpu_custom_call.1} parent=11 // pred_fallthru
          _
        // Predicated region
        $region17: #{tpu_custom_call.1} parent=11 // pred_check
          %p239 = pneg %p143
        $region18: #{tpu_custom_call.1} parent=11 // pred_check_branch
          %241 = sbr.rel (%p239) target = $region20
        $region19: #{tpu_custom_call.1} parent=11 // pred_region
          _
        $region20: #{tpu_custom_call.1} parent=11 // pred_fallthru
          _
        // Predicated region
        $region21: #{tpu_custom_call.1} parent=11 // pred_check
          %p242 = pneg %p164
        $region22: #{tpu_custom_call.1} parent=11 // pred_check_branch
          %244 = sbr.rel (%p242) target = $region24
        $region23: #{tpu_custom_call.1} parent=11 // pred_region
          %s246 = ssub.s32 512, 512
          %247 = vsyncadd [#allocation9], %s246
          %s248 = sshll.u32 [#allocation10], 4
          %s249 = int_to_ptr.vmem [resolvable:$true] %s248
          %254 = dma.hbm_to_vmem [thread:$0]  %s5, 512, %s249, [#allocation9], 128, 128, 8
        $region24: #{tpu_custom_call.1} parent=11 // pred_fallthru
          _
        // Predicated region
        $region25: #{tpu_custom_call.1} parent=11 // pred_check
          %p255 = pneg %p185
        $region26: #{tpu_custom_call.1} parent=11 // pred_check_branch
          %257 = sbr.rel (%p255) target = $region28
        $region27: #{tpu_custom_call.1} parent=11 // pred_region
          _
        $region28: #{tpu_custom_call.1} parent=11 // pred_fallthru
          _
      $region12: #{tpu_custom_call.1} parent=5 // pred_fallthru
        _
      %p258 = scmp.lt.s32.totalorder %s23, 2
      // Predicated region
      $region29: #{tpu_custom_call.1} parent=5 // pred_check
        %p259 = pneg %p258
      $region30: #{tpu_custom_call.1} parent=5 // pred_check_branch
        %261 = sbr.rel (%p259) target = $region32
      $region31: #{tpu_custom_call.1} parent=5 // pred_region
        // Predicated region
        $region33: #{tpu_custom_call.1} parent=31 // pred_check
          %p262 = pneg %p43
        $region34: #{tpu_custom_call.1} parent=31 // pred_check_branch
          %264 = sbr.rel (%p262) target = $region36
        $region35: #{tpu_custom_call.1} parent=31 // pred_region
          %s265 = sand.u32 %s33, 1
          %s266 = scalar_lea.sflag [#allocation3], %s265
          %s267 = sand.u32 %s33, 1
          %s268 = smul.addr %s267, 8
          %s269 = scalar_lea.vmem [#allocation2], %s268
          %s271 = ssub.s32 128, 128
          %272 = vsyncadd %s266, %s271
          %s273 = smul.addr %s23, 128
          %s274 = scalar_lea.hbm %s0, %s273
          %s276 = sshll.u32 %s269, 4
          %s277 = int_to_ptr.vmem [resolvable:$true] %s276
          %279 = dma.hbm_to_vmem [thread:$0]  %s274, 128, %s277, %s266
        $region36: #{tpu_custom_call.1} parent=31 // pred_fallthru
          _
        // Predicated region
        $region37: #{tpu_custom_call.1} parent=31 // pred_check
          %p280 = pneg %p69
        $region38: #{tpu_custom_call.1} parent=31 // pred_check_branch
          %282 = sbr.rel (%p280) target = $region40
        $region39: #{tpu_custom_call.1} parent=31 // pred_region
          %s283 = sand.u32 %s23, 1
          %s284 = scalar_lea.sflag [#allocation6], %s283
          %s285 = sand.u32 %s59, 1
          %s286 = smul.addr %s285, 8
          %s287 = scalar_lea.vmem [#allocation5], %s286
          %s289 = ssub.s32 128, 128
          %290 = vsyncadd %s284, %s289
          %s291 = smul.addr %s23, 128
          %s292 = scalar_lea.hbm %s1, %s291
          %s294 = sshll.u32 %s287, 4
          %s295 = int_to_ptr.vmem [resolvable:$true] %s294
          %297 = dma.hbm_to_vmem [thread:$0]  %s292, 128, %s295, %s284
        $region40: #{tpu_custom_call.1} parent=31 // pred_fallthru
          _
        // Predicated region
        $region41: #{tpu_custom_call.1} parent=31 // pred_check
          %p298 = pneg %p95
        $region42: #{tpu_custom_call.1} parent=31 // pred_check_branch
          %300 = sbr.rel (%p298) target = $region44
        $region43: #{tpu_custom_call.1} parent=31 // pred_region
          %s301 = sand.u32 %s23, 1
          %s302 = scalar_lea.sflag [#allocation6], %s301
          %s303 = sand.u32 %s85, 1
          %s304 = smul.addr %s303, 8
          %s305 = scalar_lea.vmem [#allocation7], %s304
          %s307 = ssub.s32 128, 128
          %308 = vsyncadd %s302, %s307
          %s309 = smul.addr %s23, 128
          %s310 = scalar_lea.hbm %s2, %s309
          %s312 = sshll.u32 %s305, 4
          %s313 = int_to_ptr.vmem [resolvable:$true] %s312
          %315 = dma.hbm_to_vmem [thread:$0]  %s310, 128, %s313, %s302
        $region44: #{tpu_custom_call.1} parent=31 // pred_fallthru
          _
      $region32: #{tpu_custom_call.1} parent=5 // pred_fallthru
        _
      %p316 = scmp.le.s32.totalorder 1, %s23
      %p317 = scmp.lt.s32.totalorder %s23, 3
      %p318 = pnand %p316, %p317
      %p319 = pneg %p318
      // Predicated region
      $region45: #{tpu_custom_call.1} parent=5 // pred_check
        _
      $region46: #{tpu_custom_call.1} parent=5 // pred_check_branch
        %321 = sbr.rel (%p318) target = $region48
      $region47: #{tpu_custom_call.1} parent=5 // pred_region
        %s322 = ssub.s32 %s23, 1
        %s323 = sand.u32 %s36, 1
        %s324 = scalar_lea.sflag [#allocation3], %s323
        %s325 = sand.u32 %s36, 1
        %s326 = smul.addr %s325, 8
        %s327 = scalar_lea.vmem [#allocation2], %s326
        // Predicated region
        $region49: #{tpu_custom_call.1} parent=47 // pred_check
          %p328 = pneg %p49
        $region50: #{tpu_custom_call.1} parent=47 // pred_check_branch
          %330 = sbr.rel (%p328) target = $region52
        $region51: #{tpu_custom_call.1} parent=47 // pred_region
          %331 = dma.done %s324, 128
        $region52: #{tpu_custom_call.1} parent=47 // pred_fallthru
          _
        %s332 = sand.u32 %s28, 1
        %s333 = scalar_lea.sflag [#allocation6], %s332
        %s334 = sand.u32 %s62, 1
        %s335 = smul.addr %s334, 8
        %s336 = scalar_lea.vmem [#allocation5], %s335
        // Predicated region
        $region53: #{tpu_custom_call.1} parent=47 // pred_check
          %p337 = pneg %p75
        $region54: #{tpu_custom_call.1} parent=47 // pred_check_branch
          %339 = sbr.rel (%p337) target = $region56
        $region55: #{tpu_custom_call.1} parent=47 // pred_region
          %340 = dma.done %s333, 128
        $region56: #{tpu_custom_call.1} parent=47 // pred_fallthru
          _
        %s341 = sand.u32 %s28, 1
        %s342 = scalar_lea.sflag [#allocation6], %s341
        %s343 = sand.u32 %s88, 1
        %s344 = smul.addr %s343, 8
        %s345 = scalar_lea.vmem [#allocation7], %s344
        // Predicated region
        $region57: #{tpu_custom_call.1} parent=47 // pred_check
          %p346 = pneg %p101
        $region58: #{tpu_custom_call.1} parent=47 // pred_check_branch
          %348 = sbr.rel (%p346) target = $region60
        $region59: #{tpu_custom_call.1} parent=47 // pred_region
          %349 = dma.done %s342, 128
        $region60: #{tpu_custom_call.1} parent=47 // pred_fallthru
          _
        // Predicated region
        $region61: #{tpu_custom_call.1} parent=47 // pred_check
          %p350 = pneg %p122
        $region62: #{tpu_custom_call.1} parent=47 // pred_check_branch
          %352 = sbr.rel (%p350) target = $region64
        $region63: #{tpu_custom_call.1} parent=47 // pred_region
          %353 = dma.done [#allocation9], 1536
        $region64: #{tpu_custom_call.1} parent=47 // pred_fallthru
          _
        // Predicated region
        $region65: #{tpu_custom_call.1} parent=47 // pred_check
          %p354 = pneg %p164
        $region66: #{tpu_custom_call.1} parent=47 // pred_check_branch
          %356 = sbr.rel (%p354) target = $region68
        $region67: #{tpu_custom_call.1} parent=47 // pred_region
          %357 = dma.done [#allocation9], 512
        $region68: #{tpu_custom_call.1} parent=47 // pred_fallthru
          _
        %s358 = sand.u32 %s36, 1
        %s359 = scalar_lea.sflag [#allocation3], %s358
        %s360 = sand.u32 %s36, 1
        %s361 = smul.addr %s360, 8
        %s362 = scalar_lea.vmem [#allocation2], %s361
        %p363 = pneg %p49
        %p364 = pneg %p46
        %s365 = sand.u32 %s28, 1
        %s366 = scalar_lea.sflag [#allocation6], %s365
        %s367 = sand.u32 %s62, 1
        %s368 = smul.addr %s367, 8
        %s369 = scalar_lea.vmem [#allocation5], %s368
        %p370 = pneg %p75
        %p371 = pneg %p72
        %s372 = sand.u32 %s28, 1
        %s373 = scalar_lea.sflag [#allocation6], %s372
        %s374 = sand.u32 %s88, 1
        %s375 = smul.addr %s374, 8
        %s376 = scalar_lea.vmem [#allocation7], %s375
        %p377 = pneg %p101
        %p378 = pneg %p98
        %p379 = pneg %p122
        %p380 = pneg %p119
        %p381 = pneg %p143
        %p382 = pneg %p140
        %p383 = pneg %p164
        %p384 = pneg %p161
        %p385 = pneg %p185
        %p386 = pneg %p182
        %p387 = pneg %p211
        %p388 = pneg %p208
        %s389 = sand.u32 %s198, 1
        %s390 = scalar_lea.sflag [#allocation4], %s389
        %s391 = sand.u32 %s198, 1
        %s392 = smul.addr %s391, 8
        %s393 = scalar_lea.vmem [#allocation11], %s392
        %v394 = vld [vmem:[%s327] sm:$0xff]
        %v395 = vld [vmem:[%s336] sm:$0xff]
        %v396 = vld [vmem:[%s345] sm:$0xff]
        %v397 = vld [vmem:[#allocation8] sm:$0xff]
        %v398 = vld [vmem:[#allocation8 + $0x8] sm:$0xff]
        %v399 = vld [vmem:[#allocation8 + $0x10] sm:$0xff]
        %v400 = vld [vmem:[#allocation8 + $0x18] sm:$0xff]
        %v401 = vld [vmem:[%s4] sm:$0x1]
        %v403 = vlaneseq
        %v404 = vshrl.u32 %v403, 7
        %v405 = vsub.s32 0, %v404
        %v406 = vrot.slane %v401, %v405
        %vm408 = vcmask 261120
        %v410 = vsel %vm408, %v394, 0
        %412 = vmatprep.subr.mxu0 0.0
        %413 = vmatpush1.msra.mxu0 %v397
        %414 = vmatprep.subr.mxu0 0.0
        %415 = vmatpush1.msra.mxu0 %v398
        %416 = vmatprep.subr.mxu0 0.0
        %417 = vmatpush1.msra.mxu0 %v399
        %418 = vmatprep.subr.mxu0 0.0
        %419 = vmatpush1.msra.mxu0 %v400
        %420 = vmatprep.subr.mxu0 0.0
        %421 = vmatpush1.msra.mxu0 0.0
        %422 = vmatprep.subr.mxu0 0.0
        %423 = vmatpush1.msra.mxu0 0.0
        %424 = vmatprep.subr.mxu0 0.0
        %425 = vmatpush1.msra.mxu0 0.0
        %426 = vmatprep.subr.mxu0 0.0
        %427 = vmatpush1.msra.mxu0 0.0
        %428 = vmatprep.subr.mxu0 0.0
        %429 = vmatpush1.msra.mxu0 0.0
        %430 = vmatprep.subr.mxu0 0.0
        %431 = vmatpush1.msra.mxu0 0.0
        %432 = vmatprep.subr.mxu0 0.0
        %433 = vmatpush1.msra.mxu0 0.0
        %434 = vmatprep.subr.mxu0 0.0
        %435 = vmatpush1.msra.mxu0 0.0
        %436 = vmatprep.subr.mxu0 0.0
        %437 = vmatpush1.msra.mxu0 0.0
        %438 = vmatprep.subr.mxu0 0.0
        %439 = vmatpush1.msra.mxu0 0.0
        %440 = vmatprep.subr.mxu0 0.0
        %441 = vmatpush1.msra.mxu0 0.0
        %442 = vmatprep.subr.mxu0 0.0
        %443 = vmatpush1.msra.mxu0 0.0
        %444 = vmatprep.subr.mxu0 0.0
        %445 = vmatpush1.msra.mxu0 0.0
        %446 = vmatprep.subr.mxu0 0.0
        %447 = vmatpush1.msra.mxu0 0.0
        %448 = vmatprep.subr.mxu0 0.0
        %449 = vmatpush1.msra.mxu0 0.0
        %450 = vmatprep.subr.mxu0 0.0
        %451 = vmatpush1.msra.mxu0 0.0
        %452 = vmatprep.subr.mxu0 0.0
        %453 = vmatpush1.msra.mxu0 0.0
        %454 = vmatprep.subr.mxu0 0.0
        %455 = vmatpush1.msra.mxu0 0.0
        %456 = vmatprep.subr.mxu0 0.0
        %457 = vmatpush1.msra.mxu0 0.0
        %458 = vmatprep.subr.mxu0 0.0
        %459 = vmatpush1.msra.mxu0 0.0
        %460 = vmatprep.subr.mxu0 0.0
        %461 = vmatpush1.msra.mxu0 0.0
        %462 = vmatprep.subr.mxu0 0.0
        %463 = vmatpush1.msra.mxu0 0.0
        %464 = vmatprep.subr.mxu0 0.0
        %465 = vmatpush1.msra.mxu0 0.0
        %466 = vmatprep.subr.mxu0 0.0
        %467 = vmatpush1.msra.mxu0 0.0
        %468 = vmatprep.subr.mxu0 0.0
        %469 = vmatpush1.msra.mxu0 0.0
        %470 = vmatprep.subr.mxu0 0.0
        %471 = vmatpush1.msra.mxu0 0.0
        %472 = vmatprep.subr.mxu0 0.0
        %473 = vmatpush1.msra.mxu0 0.0
        %474 = vmatprep.subr.mxu0 0.0
        %475 = vmatpush1.msra.mxu0 0.0
        %476 = vmatprep.mubr.f32.mxu0 0.0
        %477 = vmatmul.mubr.f32.gmra.mrb[0].mxu0 %v410
        %v478 = vpop.f32.mrb[0].mxu0
        %v479 = vadd.f32 %v406, %v478
        %v480 = vpop.f32.mrb[0].mxu0
        %481 = vdwg.mxu0
        %s482 = scalar_lea.vmem [#allocation8], 32
        %v483 = vld [vmem:[%s482] sm:$0xff]
        %v484 = vld [vmem:[%s482 + $0x8] sm:$0xff]
        %v485 = vld [vmem:[%s482 + $0x10] sm:$0xff]
        %v486 = vld [vmem:[%s482 + $0x18] sm:$0xff]
        %s487 = scalar_lea.vmem %s4, 1
        %v488 = vld [vmem:[%s487] sm:$0x1]
        %v490 = vlaneseq
        %v491 = vshrl.u32 %v490, 7
        %v492 = vsub.s32 0, %v491
        %v493 = vrot.slane %v488, %v492
        %v496 = vsel %vm408, %v395, 0
        %498 = vmatprep.subr.mxu0 0.0
        %499 = vmatpush1.msra.mxu0 %v483
        %500 = vmatprep.subr.mxu0 0.0
        %501 = vmatpush1.msra.mxu0 %v484
        %502 = vmatprep.subr.mxu0 0.0
        %503 = vmatpush1.msra.mxu0 %v485
        %504 = vmatprep.subr.mxu0 0.0
        %505 = vmatpush1.msra.mxu0 %v486
        %506 = vmatprep.subr.mxu0 0.0
        %507 = vmatpush1.msra.mxu0 0.0
        %508 = vmatprep.subr.mxu0 0.0
        %509 = vmatpush1.msra.mxu0 0.0
        %510 = vmatprep.subr.mxu0 0.0
        %511 = vmatpush1.msra.mxu0 0.0
        %512 = vmatprep.subr.mxu0 0.0
        %513 = vmatpush1.msra.mxu0 0.0
        %514 = vmatprep.subr.mxu0 0.0
        %515 = vmatpush1.msra.mxu0 0.0
        %516 = vmatprep.subr.mxu0 0.0
        %517 = vmatpush1.msra.mxu0 0.0
        %518 = vmatprep.subr.mxu0 0.0
        %519 = vmatpush1.msra.mxu0 0.0
        %520 = vmatprep.subr.mxu0 0.0
        %521 = vmatpush1.msra.mxu0 0.0
        %522 = vmatprep.subr.mxu0 0.0
        %523 = vmatpush1.msra.mxu0 0.0
        %524 = vmatprep.subr.mxu0 0.0
        %525 = vmatpush1.msra.mxu0 0.0
        %526 = vmatprep.subr.mxu0 0.0
        %527 = vmatpush1.msra.mxu0 0.0
        %528 = vmatprep.subr.mxu0 0.0
        %529 = vmatpush1.msra.mxu0 0.0
        %530 = vmatprep.subr.mxu0 0.0
        %531 = vmatpush1.msra.mxu0 0.0
        %532 = vmatprep.subr.mxu0 0.0
        %533 = vmatpush1.msra.mxu0 0.0
        %534 = vmatprep.subr.mxu0 0.0
        %535 = vmatpush1.msra.mxu0 0.0
        %536 = vmatprep.subr.mxu0 0.0
        %537 = vmatpush1.msra.mxu0 0.0
        %538 = vmatprep.subr.mxu0 0.0
        %539 = vmatpush1.msra.mxu0 0.0
        %540 = vmatprep.subr.mxu0 0.0
        %541 = vmatpush1.msra.mxu0 0.0
        %542 = vmatprep.subr.mxu0 0.0
        %543 = vmatpush1.msra.mxu0 0.0
        %544 = vmatprep.subr.mxu0 0.0
        %545 = vmatpush1.msra.mxu0 0.0
        %546 = vmatprep.subr.mxu0 0.0
        %547 = vmatpush1.msra.mxu0 0.0
        %548 = vmatprep.subr.mxu0 0.0
        %549 = vmatpush1.msra.mxu0 0.0
        %550 = vmatprep.subr.mxu0 0.0
        %551 = vmatpush1.msra.mxu0 0.0
        %552 = vmatprep.subr.mxu0 0.0
        %553 = vmatpush1.msra.mxu0 0.0
        %554 = vmatprep.subr.mxu0 0.0
        %555 = vmatpush1.msra.mxu0 0.0
        %556 = vmatprep.subr.mxu0 0.0
        %557 = vmatpush1.msra.mxu0 0.0
        %558 = vmatprep.subr.mxu0 0.0
        %559 = vmatpush1.msra.mxu0 0.0
        %560 = vmatprep.subr.mxu0 0.0
        %561 = vmatpush1.msra.mxu0 0.0
        %562 = vmatprep.mubr.f32.mxu0 0.0
        %563 = vmatmul.mubr.f32.gmra.mrb[0].mxu0 %v496
        %v564 = vpop.f32.mrb[0].mxu0
        %v565 = vadd.f32 %v493, %v564
        %v566 = vpop.f32.mrb[0].mxu0
        %567 = vdwg.mxu0
        %s568 = scalar_lea.vmem [#allocation8], 64
        %v569 = vld [vmem:[%s568] sm:$0xff]
        %v570 = vld [vmem:[%s568 + $0x8] sm:$0xff]
        %v571 = vld [vmem:[%s568 + $0x10] sm:$0xff]
        %v572 = vld [vmem:[%s568 + $0x18] sm:$0xff]
        %s573 = scalar_lea.vmem %s4, 2
        %v574 = vld [vmem:[%s573] sm:$0x1]
        %v576 = vlaneseq
        %v577 = vshrl.u32 %v576, 7
        %v578 = vsub.s32 0, %v577
        %v579 = vrot.slane %v574, %v578
        %v582 = vsel %vm408, %v396, 0
        %584 = vmatprep.subr.mxu0 0.0
        %585 = vmatpush1.msra.mxu0 %v569
        %586 = vmatprep.subr.mxu0 0.0
        %587 = vmatpush1.msra.mxu0 %v570
        %588 = vmatprep.subr.mxu0 0.0
        %589 = vmatpush1.msra.mxu0 %v571
        %590 = vmatprep.subr.mxu0 0.0
        %591 = vmatpush1.msra.mxu0 %v572
        %592 = vmatprep.subr.mxu0 0.0
        %593 = vmatpush1.msra.mxu0 0.0
        %594 = vmatprep.subr.mxu0 0.0
        %595 = vmatpush1.msra.mxu0 0.0
        %596 = vmatprep.subr.mxu0 0.0
        %597 = vmatpush1.msra.mxu0 0.0
        %598 = vmatprep.subr.mxu0 0.0
        %599 = vmatpush1.msra.mxu0 0.0
        %600 = vmatprep.subr.mxu0 0.0
        %601 = vmatpush1.msra.mxu0 0.0
        %602 = vmatprep.subr.mxu0 0.0
        %603 = vmatpush1.msra.mxu0 0.0
        %604 = vmatprep.subr.mxu0 0.0
        %605 = vmatpush1.msra.mxu0 0.0
        %606 = vmatprep.subr.mxu0 0.0
        %607 = vmatpush1.msra.mxu0 0.0
        %608 = vmatprep.subr.mxu0 0.0
        %609 = vmatpush1.msra.mxu0 0.0
        %610 = vmatprep.subr.mxu0 0.0
        %611 = vmatpush1.msra.mxu0 0.0
        %612 = vmatprep.subr.mxu0 0.0
        %613 = vmatpush1.msra.mxu0 0.0
        %614 = vmatprep.subr.mxu0 0.0
        %615 = vmatpush1.msra.mxu0 0.0
        %616 = vmatprep.subr.mxu0 0.0
        %617 = vmatpush1.msra.mxu0 0.0
        %618 = vmatprep.subr.mxu0 0.0
        %619 = vmatpush1.msra.mxu0 0.0
        %620 = vmatprep.subr.mxu0 0.0
        %621 = vmatpush1.msra.mxu0 0.0
        %622 = vmatprep.subr.mxu0 0.0
        %623 = vmatpush1.msra.mxu0 0.0
        %624 = vmatprep.subr.mxu0 0.0
        %625 = vmatpush1.msra.mxu0 0.0
        %626 = vmatprep.subr.mxu0 0.0
        %627 = vmatpush1.msra.mxu0 0.0
        %628 = vmatprep.subr.mxu0 0.0
        %629 = vmatpush1.msra.mxu0 0.0
        %630 = vmatprep.subr.mxu0 0.0
        %631 = vmatpush1.msra.mxu0 0.0
        %632 = vmatprep.subr.mxu0 0.0
        %633 = vmatpush1.msra.mxu0 0.0
        %634 = vmatprep.subr.mxu0 0.0
        %635 = vmatpush1.msra.mxu0 0.0
        %636 = vmatprep.subr.mxu0 0.0
        %637 = vmatpush1.msra.mxu0 0.0
        %638 = vmatprep.subr.mxu0 0.0
        %639 = vmatpush1.msra.mxu0 0.0
        %640 = vmatprep.subr.mxu0 0.0
        %641 = vmatpush1.msra.mxu0 0.0
        %642 = vmatprep.subr.mxu0 0.0
        %643 = vmatpush1.msra.mxu0 0.0
        %644 = vmatprep.subr.mxu0 0.0
        %645 = vmatpush1.msra.mxu0 0.0
        %646 = vmatprep.subr.mxu0 0.0
        %647 = vmatpush1.msra.mxu0 0.0
        %648 = vmatprep.mubr.f32.mxu0 0.0
        %649 = vmatmul.mubr.f32.gmra.mrb[0].mxu0 %v582
        %v650 = vpop.f32.mrb[0].mxu0
        %v651 = vadd.f32 %v579, %v650
        %v652 = vpop.f32.mrb[0].mxu0
        %653 = vdwg.mxu0
        %vm654 = vcmask 64512
        %v656 = vsel %vm654, %v479, 0
        %v659 = vsel %vm654, %v565, 0
        %661 = vmatprep.subr.mxu0 0.0
        %662 = vmatpush1.xpose.msra.mxu0 %v659
        %663 = vmatprep.subr.mxu0 0.0
        %664 = vmatpush1.xpose.msra.mxu0 0.0
        %665 = vmatprep.subr.mxu0 0.0
        %666 = vmatpush1.xpose.msra.mxu0 0.0
        %667 = vmatprep.subr.mxu0 0.0
        %668 = vmatpush1.xpose.msra.mxu0 0.0
        %669 = vmatprep.subr.mxu0 0.0
        %670 = vmatpush1.xpose.msra.mxu0 0.0
        %671 = vmatprep.subr.mxu0 0.0
        %672 = vmatpush1.xpose.msra.mxu0 0.0
        %673 = vmatprep.subr.mxu0 0.0
        %674 = vmatpush1.xpose.msra.mxu0 0.0
        %675 = vmatprep.subr.mxu0 0.0
        %676 = vmatpush1.xpose.msra.mxu0 0.0
        %677 = vmatprep.subr.mxu0 0.0
        %678 = vmatpush1.xpose.msra.mxu0 0.0
        %679 = vmatprep.subr.mxu0 0.0
        %680 = vmatpush1.xpose.msra.mxu0 0.0
        %681 = vmatprep.subr.mxu0 0.0
        %682 = vmatpush1.xpose.msra.mxu0 0.0
        %683 = vmatprep.subr.mxu0 0.0
        %684 = vmatpush1.xpose.msra.mxu0 0.0
        %685 = vmatprep.subr.mxu0 0.0
        %686 = vmatpush1.xpose.msra.mxu0 0.0
        %687 = vmatprep.subr.mxu0 0.0
        %688 = vmatpush1.xpose.msra.mxu0 0.0
        %689 = vmatprep.subr.mxu0 0.0
        %690 = vmatpush1.xpose.msra.mxu0 0.0
        %691 = vmatprep.subr.mxu0 0.0
        %692 = vmatpush1.xpose.msra.mxu0 0.0
        %693 = vmatprep.subr.mxu0 0.0
        %694 = vmatpush1.xpose.msra.mxu0 0.0
        %695 = vmatprep.subr.mxu0 0.0
        %696 = vmatpush1.xpose.msra.mxu0 0.0
        %697 = vmatprep.subr.mxu0 0.0
        %698 = vmatpush1.xpose.msra.mxu0 0.0
        %699 = vmatprep.subr.mxu0 0.0
        %700 = vmatpush1.xpose.msra.mxu0 0.0
        %701 = vmatprep.subr.mxu0 0.0
        %702 = vmatpush1.xpose.msra.mxu0 0.0
        %703 = vmatprep.subr.mxu0 0.0
        %704 = vmatpush1.xpose.msra.mxu0 0.0
        %705 = vmatprep.subr.mxu0 0.0
        %706 = vmatpush1.xpose.msra.mxu0 0.0
        %707 = vmatprep.subr.mxu0 0.0
        %708 = vmatpush1.xpose.msra.mxu0 0.0
        %709 = vmatprep.subr.mxu0 0.0
        %710 = vmatpush1.xpose.msra.mxu0 0.0
        %711 = vmatprep.subr.mxu0 0.0
        %712 = vmatpush1.xpose.msra.mxu0 0.0
        %713 = vmatprep.subr.mxu0 0.0
        %714 = vmatpush1.xpose.msra.mxu0 0.0
        %715 = vmatprep.subr.mxu0 0.0
        %716 = vmatpush1.xpose.msra.mxu0 0.0
        %717 = vmatprep.subr.mxu0 0.0
        %718 = vmatpush1.xpose.msra.mxu0 0.0
        %719 = vmatprep.subr.mxu0 0.0
        %720 = vmatpush1.xpose.msra.mxu0 0.0
        %721 = vmatprep.subr.mxu0 0.0
        %722 = vmatpush1.xpose.msra.mxu0 0.0
        %723 = vmatprep.subr.mxu0 0.0
        %724 = vmatpush1.xpose.msra.mxu0 0.0
        %725 = vmatprep.mubr.f32.mxu0 0.0
        %726 = vmatmul.mubr.f32.gmra.mrb[0].mxu0 %v656
        %v727 = vpop.f32.mrb[0].mxu0
        %v728 = vadd.f32 0.0, %v727
        %v729 = vpop.f32.mrb[0].mxu0
        %730 = vdwg.mxu0
        %v731 = vsel %vm654, %v728, -inf
        %732 = vmax.xlane.f32.xlu0 %v731
        %v733 = vpop.xlane.xlu0 %732
        %v734 = vsub.f32 %v728, %v733
        %v735 = vmul.f32 %v734, 1.442695
        %v736 = vpow.pop %v735
        %v737 = vsel %vm654, %v736, 0.0
        %738 = vadd.xlane.f32.xlu0 %v737
        %v739 = vpop.xlane.xlu0 %738
        %v740 = vrcp.pop %v739
        %v741 = vmul.f32 %v739, %v740
        %v742 = vsub.f32 2.0, %v741
        %v743 = vmul.f32 %v740, %v742
        %v744 = vmul.f32 %v736, %v743
        %v746 = vsel %vm654, %v744, 0
        %748 = vmatprep.subr.mxu0 0.0
        %749 = vmatpush1.msra.mxu0 %v651
        %750 = vmatprep.subr.mxu0 0.0
        %751 = vmatpush1.msra.mxu0 0.0
        %752 = vmatprep.subr.mxu0 0.0
        %753 = vmatpush1.msra.mxu0 0.0
        %754 = vmatprep.subr.mxu0 0.0
        %755 = vmatpush1.msra.mxu0 0.0
        %756 = vmatprep.subr.mxu0 0.0
        %757 = vmatpush1.msra.mxu0 0.0
        %758 = vmatprep.subr.mxu0 0.0
        %759 = vmatpush1.msra.mxu0 0.0
        %760 = vmatprep.subr.mxu0 0.0
        %761 = vmatpush1.msra.mxu0 0.0
        %762 = vmatprep.subr.mxu0 0.0
        %763 = vmatpush1.msra.mxu0 0.0
        %764 = vmatprep.subr.mxu0 0.0
        %765 = vmatpush1.msra.mxu0 0.0
        %766 = vmatprep.subr.mxu0 0.0
        %767 = vmatpush1.msra.mxu0 0.0
        %768 = vmatprep.subr.mxu0 0.0
        %769 = vmatpush1.msra.mxu0 0.0
        %770 = vmatprep.subr.mxu0 0.0
        %771 = vmatpush1.msra.mxu0 0.0
        %772 = vmatprep.subr.mxu0 0.0
        %773 = vmatpush1.msra.mxu0 0.0
        %774 = vmatprep.subr.mxu0 0.0
        %775 = vmatpush1.msra.mxu0 0.0
        %776 = vmatprep.subr.mxu0 0.0
        %777 = vmatpush1.msra.mxu0 0.0
        %778 = vmatprep.subr.mxu0 0.0
        %779 = vmatpush1.msra.mxu0 0.0
        %780 = vmatprep.subr.mxu0 0.0
        %781 = vmatpush1.msra.mxu0 0.0
        %782 = vmatprep.subr.mxu0 0.0
        %783 = vmatpush1.msra.mxu0 0.0
        %784 = vmatprep.subr.mxu0 0.0
        %785 = vmatpush1.msra.mxu0 0.0
        %786 = vmatprep.subr.mxu0 0.0
        %787 = vmatpush1.msra.mxu0 0.0
        %788 = vmatprep.subr.mxu0 0.0
        %789 = vmatpush1.msra.mxu0 0.0
        %790 = vmatprep.subr.mxu0 0.0
        %791 = vmatpush1.msra.mxu0 0.0
        %792 = vmatprep.subr.mxu0 0.0
        %793 = vmatpush1.msra.mxu0 0.0
        %794 = vmatprep.subr.mxu0 0.0
        %795 = vmatpush1.msra.mxu0 0.0
        %796 = vmatprep.subr.mxu0 0.0
        %797 = vmatpush1.msra.mxu0 0.0
        %798 = vmatprep.subr.mxu0 0.0
        %799 = vmatpush1.msra.mxu0 0.0
        %800 = vmatprep.subr.mxu0 0.0
        %801 = vmatpush1.msra.mxu0 0.0
        %802 = vmatprep.subr.mxu0 0.0
        %803 = vmatpush1.msra.mxu0 0.0
        %804 = vmatprep.subr.mxu0 0.0
        %805 = vmatpush1.msra.mxu0 0.0
        %806 = vmatprep.subr.mxu0 0.0
        %807 = vmatpush1.msra.mxu0 0.0
        %808 = vmatprep.subr.mxu0 0.0
        %809 = vmatpush1.msra.mxu0 0.0
        %810 = vmatprep.subr.mxu0 0.0
        %811 = vmatpush1.msra.mxu0 0.0
        %812 = vmatprep.mubr.f32.mxu0 0.0
        %813 = vmatmul.mubr.f32.gmra.mrb[0].mxu0 %v746
        %v814 = vpop.f32.mrb[0].mxu0
        %v815 = vadd.f32 0.0, %v814
        %v816 = vpop.f32.mrb[0].mxu0
        %817 = vdwg.mxu0
        %v818 = vld [vmem:[#allocation10] sm:$0xff]
        %819 = vrot.lane.b32.xlu0 %v479, 120
        %v820 = vpop.permute.xlu0 %819
        %821 = vrot.lane.b32.xlu0 %v565, 120
        %v822 = vpop.permute.xlu0 %821
        %v823 = vsel %vm654, %v820, 0
        %v825 = vsel %vm654, %v822, 0
        %827 = vmatprep.subr.mxu0 0.0
        %828 = vmatpush1.xpose.msra.mxu0 %v825
        %829 = vmatprep.subr.mxu0 0.0
        %830 = vmatpush1.xpose.msra.mxu0 0.0
        %831 = vmatprep.subr.mxu0 0.0
        %832 = vmatpush1.xpose.msra.mxu0 0.0
        %833 = vmatprep.subr.mxu0 0.0
        %834 = vmatpush1.xpose.msra.mxu0 0.0
        %835 = vmatprep.subr.mxu0 0.0
        %836 = vmatpush1.xpose.msra.mxu0 0.0
        %837 = vmatprep.subr.mxu0 0.0
        %838 = vmatpush1.xpose.msra.mxu0 0.0
        %839 = vmatprep.subr.mxu0 0.0
        %840 = vmatpush1.xpose.msra.mxu0 0.0
        %841 = vmatprep.subr.mxu0 0.0
        %842 = vmatpush1.xpose.msra.mxu0 0.0
        %843 = vmatprep.subr.mxu0 0.0
        %844 = vmatpush1.xpose.msra.mxu0 0.0
        %845 = vmatprep.subr.mxu0 0.0
        %846 = vmatpush1.xpose.msra.mxu0 0.0
        %847 = vmatprep.subr.mxu0 0.0
        %848 = vmatpush1.xpose.msra.mxu0 0.0
        %849 = vmatprep.subr.mxu0 0.0
        %850 = vmatpush1.xpose.msra.mxu0 0.0
        %851 = vmatprep.subr.mxu0 0.0
        %852 = vmatpush1.xpose.msra.mxu0 0.0
        %853 = vmatprep.subr.mxu0 0.0
        %854 = vmatpush1.xpose.msra.mxu0 0.0
        %855 = vmatprep.subr.mxu0 0.0
        %856 = vmatpush1.xpose.msra.mxu0 0.0
        %857 = vmatprep.subr.mxu0 0.0
        %858 = vmatpush1.xpose.msra.mxu0 0.0
        %859 = vmatprep.subr.mxu0 0.0
        %860 = vmatpush1.xpose.msra.mxu0 0.0
        %861 = vmatprep.subr.mxu0 0.0
        %862 = vmatpush1.xpose.msra.mxu0 0.0
        %863 = vmatprep.subr.mxu0 0.0
        %864 = vmatpush1.xpose.msra.mxu0 0.0
        %865 = vmatprep.subr.mxu0 0.0
        %866 = vmatpush1.xpose.msra.mxu0 0.0
        %867 = vmatprep.subr.mxu0 0.0
        %868 = vmatpush1.xpose.msra.mxu0 0.0
        %869 = vmatprep.subr.mxu0 0.0
        %870 = vmatpush1.xpose.msra.mxu0 0.0
        %871 = vmatprep.subr.mxu0 0.0
        %872 = vmatpush1.xpose.msra.mxu0 0.0
        %873 = vmatprep.subr.mxu0 0.0
        %874 = vmatpush1.xpose.msra.mxu0 0.0
        %875 = vmatprep.subr.mxu0 0.0
        %876 = vmatpush1.xpose.msra.mxu0 0.0
        %877 = vmatprep.subr.mxu0 0.0
        %878 = vmatpush1.xpose.msra.mxu0 0.0
        %879 = vmatprep.subr.mxu0 0.0
        %880 = vmatpush1.xpose.msra.mxu0 0.0
        %881 = vmatprep.subr.mxu0 0.0
        %882 = vmatpush1.xpose.msra.mxu0 0.0
        %883 = vmatprep.subr.mxu0 0.0
        %884 = vmatpush1.xpose.msra.mxu0 0.0
        %885 = vmatprep.subr.mxu0 0.0
        %886 = vmatpush1.xpose.msra.mxu0 0.0
        %887 = vmatprep.subr.mxu0 0.0
        %888 = vmatpush1.xpose.msra.mxu0 0.0
        %889 = vmatprep.subr.mxu0 0.0
        %890 = vmatpush1.xpose.msra.mxu0 0.0
        %891 = vmatprep.mubr.f32.mxu0 0.0
        %892 = vmatmul.mubr.f32.gmra.mrb[0].mxu0 %v823
        %v893 = vpop.f32.mrb[0].mxu0
        %v894 = vadd.f32 0.0, %v893
        %v895 = vpop.f32.mrb[0].mxu0
        %896 = vdwg.mxu0
        %v897 = vsel %vm654, %v894, -inf
        %898 = vmax.xlane.f32.xlu0 %v897
        %v899 = vpop.xlane.xlu0 %898
        %v900 = vsub.f32 %v894, %v899
        %v901 = vmul.f32 %v900, 1.442695
        %v902 = vpow.pop %v901
        %v903 = vsel %vm654, %v902, 0.0
        %904 = vadd.xlane.f32.xlu0 %v903
        %v905 = vpop.xlane.xlu0 %904
        %v906 = vrcp.pop %v905
        %v907 = vmul.f32 %v905, %v906
        %v908 = vsub.f32 2.0, %v907
        %v909 = vmul.f32 %v906, %v908
        %v910 = vmul.f32 %v902, %v909
        %912 = vrot.lane.b32.xlu0 %v651, 120
        %v913 = vpop.permute.xlu0 %912
        %v916 = vsel %vm654, %v910, 0
        %918 = vmatprep.subr.mxu0 0.0
        %919 = vmatpush1.msra.mxu0 %v913
        %920 = vmatprep.subr.mxu0 0.0
        %921 = vmatpush1.msra.mxu0 0.0
        %922 = vmatprep.subr.mxu0 0.0
        %923 = vmatpush1.msra.mxu0 0.0
        %924 = vmatprep.subr.mxu0 0.0
        %925 = vmatpush1.msra.mxu0 0.0
        %926 = vmatprep.subr.mxu0 0.0
        %927 = vmatpush1.msra.mxu0 0.0
        %928 = vmatprep.subr.mxu0 0.0
        %929 = vmatpush1.msra.mxu0 0.0
        %930 = vmatprep.subr.mxu0 0.0
        %931 = vmatpush1.msra.mxu0 0.0
        %932 = vmatprep.subr.mxu0 0.0
        %933 = vmatpush1.msra.mxu0 0.0
        %934 = vmatprep.subr.mxu0 0.0
        %935 = vmatpush1.msra.mxu0 0.0
        %936 = vmatprep.subr.mxu0 0.0
        %937 = vmatpush1.msra.mxu0 0.0
        %938 = vmatprep.subr.mxu0 0.0
        %939 = vmatpush1.msra.mxu0 0.0
        %940 = vmatprep.subr.mxu0 0.0
        %941 = vmatpush1.msra.mxu0 0.0
        %942 = vmatprep.subr.mxu0 0.0
        %943 = vmatpush1.msra.mxu0 0.0
        %944 = vmatprep.subr.mxu0 0.0
        %945 = vmatpush1.msra.mxu0 0.0
        %946 = vmatprep.subr.mxu0 0.0
        %947 = vmatpush1.msra.mxu0 0.0
        %948 = vmatprep.subr.mxu0 0.0
        %949 = vmatpush1.msra.mxu0 0.0
        %950 = vmatprep.subr.mxu0 0.0
        %951 = vmatpush1.msra.mxu0 0.0
        %952 = vmatprep.subr.mxu0 0.0
        %953 = vmatpush1.msra.mxu0 0.0
        %954 = vmatprep.subr.mxu0 0.0
        %955 = vmatpush1.msra.mxu0 0.0
        %956 = vmatprep.subr.mxu0 0.0
        %957 = vmatpush1.msra.mxu0 0.0
        %958 = vmatprep.subr.mxu0 0.0
        %959 = vmatpush1.msra.mxu0 0.0
        %960 = vmatprep.subr.mxu0 0.0
        %961 = vmatpush1.msra.mxu0 0.0
        %962 = vmatprep.subr.mxu0 0.0
        %963 = vmatpush1.msra.mxu0 0.0
        %964 = vmatprep.subr.mxu0 0.0
        %965 = vmatpush1.msra.mxu0 0.0
        %966 = vmatprep.subr.mxu0 0.0
        %967 = vmatpush1.msra.mxu0 0.0
        %968 = vmatprep.subr.mxu0 0.0
        %969 = vmatpush1.msra.mxu0 0.0
        %970 = vmatprep.subr.mxu0 0.0
        %971 = vmatpush1.msra.mxu0 0.0
        %972 = vmatprep.subr.mxu0 0.0
        %973 = vmatpush1.msra.mxu0 0.0
        %974 = vmatprep.subr.mxu0 0.0
        %975 = vmatpush1.msra.mxu0 0.0
        %976 = vmatprep.subr.mxu0 0.0
        %977 = vmatpush1.msra.mxu0 0.0
        %978 = vmatprep.subr.mxu0 0.0
        %979 = vmatpush1.msra.mxu0 0.0
        %980 = vmatprep.subr.mxu0 0.0
        %981 = vmatpush1.msra.mxu0 0.0
        %982 = vmatprep.mubr.f32.mxu0 0.0
        %983 = vmatmul.mubr.f32.gmra.mrb[0].mxu0 %v916
        %v984 = vpop.f32.mrb[0].mxu0
        %v985 = vadd.f32 0.0, %v984
        %v986 = vpop.f32.mrb[0].mxu0
        %987 = vdwg.mxu0
        %v988 = vld [vmem:[#allocation10 + $0x8] sm:$0xff]
        %v990 = vsel %vm654, %v985, 0
        %992 = vmatprep.subr.mxu0 0.0
        %993 = vmatpush1.msra.mxu0 %v988
        %994 = vmatprep.subr.mxu0 0.0
        %995 = vmatpush1.msra.mxu0 0.0
        %996 = vmatprep.subr.mxu0 0.0
        %997 = vmatpush1.msra.mxu0 0.0
        %998 = vmatprep.subr.mxu0 0.0
        %999 = vmatpush1.msra.mxu0 0.0
        %1000 = vmatprep.subr.mxu0 0.0
        %1001 = vmatpush1.msra.mxu0 0.0
        %1002 = vmatprep.subr.mxu0 0.0
        %1003 = vmatpush1.msra.mxu0 0.0
        %1004 = vmatprep.subr.mxu0 0.0
        %1005 = vmatpush1.msra.mxu0 0.0
        %1006 = vmatprep.subr.mxu0 0.0
        %1007 = vmatpush1.msra.mxu0 0.0
        %1008 = vmatprep.subr.mxu0 0.0
        %1009 = vmatpush1.msra.mxu0 0.0
        %1010 = vmatprep.subr.mxu0 0.0
        %1011 = vmatpush1.msra.mxu0 0.0
        %1012 = vmatprep.subr.mxu0 0.0
        %1013 = vmatpush1.msra.mxu0 0.0
        %1014 = vmatprep.subr.mxu0 0.0
        %1015 = vmatpush1.msra.mxu0 0.0
        %1016 = vmatprep.subr.mxu0 0.0
        %1017 = vmatpush1.msra.mxu0 0.0
        %1018 = vmatprep.subr.mxu0 0.0
        %1019 = vmatpush1.msra.mxu0 0.0
        %1020 = vmatprep.subr.mxu0 0.0
        %1021 = vmatpush1.msra.mxu0 0.0
        %1022 = vmatprep.subr.mxu0 0.0
        %1023 = vmatpush1.msra.mxu0 0.0
        %1024 = vmatprep.subr.mxu0 0.0
        %1025 = vmatpush1.msra.mxu0 0.0
        %1026 = vmatprep.subr.mxu0 0.0
        %1027 = vmatpush1.msra.mxu0 0.0
        %1028 = vmatprep.subr.mxu0 0.0
        %1029 = vmatpush1.msra.mxu0 0.0
        %1030 = vmatprep.subr.mxu0 0.0
        %1031 = vmatpush1.msra.mxu0 0.0
        %1032 = vmatprep.subr.mxu0 0.0
        %1033 = vmatpush1.msra.mxu0 0.0
        %1034 = vmatprep.subr.mxu0 0.0
        %1035 = vmatpush1.msra.mxu0 0.0
        %1036 = vmatprep.subr.mxu0 0.0
        %1037 = vmatpush1.msra.mxu0 0.0
        %1038 = vmatprep.subr.mxu0 0.0
        %1039 = vmatpush1.msra.mxu0 0.0
        %1040 = vmatprep.subr.mxu0 0.0
        %1041 = vmatpush1.msra.mxu0 0.0
        %1042 = vmatprep.subr.mxu0 0.0
        %1043 = vmatpush1.msra.mxu0 0.0
        %1044 = vmatprep.subr.mxu0 0.0
        %1045 = vmatpush1.msra.mxu0 0.0
        %1046 = vmatprep.subr.mxu0 0.0
        %1047 = vmatpush1.msra.mxu0 0.0
        %1048 = vmatprep.subr.mxu0 0.0
        %1049 = vmatpush1.msra.mxu0 0.0
        %1050 = vmatprep.subr.mxu0 0.0
        %1051 = vmatpush1.msra.mxu0 0.0
        %1052 = vmatprep.subr.mxu0 0.0
        %1053 = vmatpush1.msra.mxu0 0.0
        %1054 = vmatprep.subr.mxu0 0.0
        %1055 = vmatpush1.msra.mxu0 0.0
        %1056 = vmatprep.mubr.f32.mxu0 0.0
        %1057 = vmatmul.mubr.f32.gmra.mrb[0].mxu0 %v990
        %v1058 = vpop.f32.mrb[0].mxu0
        %v1059 = vadd.f32 0.0, %v1058
        %v1060 = vpop.f32.mrb[0].mxu0
        %1061 = vdwg.mxu0
        %v1063 = vsel %vm654, %v815, 0
        %1065 = vmatprep.subr.mxu0 0.0
        %1066 = vmatpush1.msra.mxu0 %v818
        %1067 = vmatprep.subr.mxu0 0.0
        %1068 = vmatpush1.msra.mxu0 0.0
        %1069 = vmatprep.subr.mxu0 0.0
        %1070 = vmatpush1.msra.mxu0 0.0
        %1071 = vmatprep.subr.mxu0 0.0
        %1072 = vmatpush1.msra.mxu0 0.0
        %1073 = vmatprep.subr.mxu0 0.0
        %1074 = vmatpush1.msra.mxu0 0.0
        %1075 = vmatprep.subr.mxu0 0.0
        %1076 = vmatpush1.msra.mxu0 0.0
        %1077 = vmatprep.subr.mxu0 0.0
        %1078 = vmatpush1.msra.mxu0 0.0
        %1079 = vmatprep.subr.mxu0 0.0
        %1080 = vmatpush1.msra.mxu0 0.0
        %1081 = vmatprep.subr.mxu0 0.0
        %1082 = vmatpush1.msra.mxu0 0.0
        %1083 = vmatprep.subr.mxu0 0.0
        %1084 = vmatpush1.msra.mxu0 0.0
        %1085 = vmatprep.subr.mxu0 0.0
        %1086 = vmatpush1.msra.mxu0 0.0
        %1087 = vmatprep.subr.mxu0 0.0
        %1088 = vmatpush1.msra.mxu0 0.0
        %1089 = vmatprep.subr.mxu0 0.0
        %1090 = vmatpush1.msra.mxu0 0.0
        %1091 = vmatprep.subr.mxu0 0.0
        %1092 = vmatpush1.msra.mxu0 0.0
        %1093 = vmatprep.subr.mxu0 0.0
        %1094 = vmatpush1.msra.mxu0 0.0
        %1095 = vmatprep.subr.mxu0 0.0
        %1096 = vmatpush1.msra.mxu0 0.0
        %1097 = vmatprep.subr.mxu0 0.0
        %1098 = vmatpush1.msra.mxu0 0.0
        %1099 = vmatprep.subr.mxu0 0.0
        %1100 = vmatpush1.msra.mxu0 0.0
        %1101 = vmatprep.subr.mxu0 0.0
        %1102 = vmatpush1.msra.mxu0 0.0
        %1103 = vmatprep.subr.mxu0 0.0
        %1104 = vmatpush1.msra.mxu0 0.0
        %1105 = vmatprep.subr.mxu0 0.0
        %1106 = vmatpush1.msra.mxu0 0.0
        %1107 = vmatprep.subr.mxu0 0.0
        %1108 = vmatpush1.msra.mxu0 0.0
        %1109 = vmatprep.subr.mxu0 0.0
        %1110 = vmatpush1.msra.mxu0 0.0
        %1111 = vmatprep.subr.mxu0 0.0
        %1112 = vmatpush1.msra.mxu0 0.0
        %1113 = vmatprep.subr.mxu0 0.0
        %1114 = vmatpush1.msra.mxu0 0.0
        %1115 = vmatprep.subr.mxu0 0.0
        %1116 = vmatpush1.msra.mxu0 0.0
        %1117 = vmatprep.subr.mxu0 0.0
        %1118 = vmatpush1.msra.mxu0 0.0
        %1119 = vmatprep.subr.mxu0 0.0
        %1120 = vmatpush1.msra.mxu0 0.0
        %1121 = vmatprep.subr.mxu0 0.0
        %1122 = vmatpush1.msra.mxu0 0.0
        %1123 = vmatprep.subr.mxu0 0.0
        %1124 = vmatpush1.msra.mxu0 0.0
        %1125 = vmatprep.subr.mxu0 0.0
        %1126 = vmatpush1.msra.mxu0 0.0
        %1127 = vmatprep.subr.mxu0 0.0
        %1128 = vmatpush1.msra.mxu0 0.0
        %1129 = vmatprep.mubr.f32.mxu0 0.0
        %1130 = vmatmul.mubr.f32.gmra.mrb[0].mxu0 %v1063
        %v1131 = vpop.f32.mrb[0].mxu0
        %v1132 = vadd.f32 %v1059, %v1131
        %v1133 = vpop.f32.mrb[0].mxu0
        %1134 = vdwg.mxu0
        %1135 = vrot.lane.b32.xlu0 %v479, 112
        %v1136 = vpop.permute.xlu0 %1135
        %1137 = vrot.lane.b32.xlu0 %v565, 112
        %v1138 = vpop.permute.xlu0 %1137
        %v1139 = vsel %vm654, %v1136, 0
        %v1141 = vsel %vm654, %v1138, 0
        %1143 = vmatprep.subr.mxu0 0.0
        %1144 = vmatpush1.xpose.msra.mxu0 %v1141
        %1145 = vmatprep.subr.mxu0 0.0
        %1146 = vmatpush1.xpose.msra.mxu0 0.0
        %1147 = vmatprep.subr.mxu0 0.0
        %1148 = vmatpush1.xpose.msra.mxu0 0.0
        %1149 = vmatprep.subr.mxu0 0.0
        %1150 = vmatpush1.xpose.msra.mxu0 0.0
        %1151 = vmatprep.subr.mxu0 0.0
        %1152 = vmatpush1.xpose.msra.mxu0 0.0
        %1153 = vmatprep.subr.mxu0 0.0
        %1154 = vmatpush1.xpose.msra.mxu0 0.0
        %1155 = vmatprep.subr.mxu0 0.0
        %1156 = vmatpush1.xpose.msra.mxu0 0.0
        %1157 = vmatprep.subr.mxu0 0.0
        %1158 = vmatpush1.xpose.msra.mxu0 0.0
        %1159 = vmatprep.subr.mxu0 0.0
        %1160 = vmatpush1.xpose.msra.mxu0 0.0
        %1161 = vmatprep.subr.mxu0 0.0
        %1162 = vmatpush1.xpose.msra.mxu0 0.0
        %1163 = vmatprep.subr.mxu0 0.0
        %1164 = vmatpush1.xpose.msra.mxu0 0.0
        %1165 = vmatprep.subr.mxu0 0.0
        %1166 = vmatpush1.xpose.msra.mxu0 0.0
        %1167 = vmatprep.subr.mxu0 0.0
        %1168 = vmatpush1.xpose.msra.mxu0 0.0
        %1169 = vmatprep.subr.mxu0 0.0
        %1170 = vmatpush1.xpose.msra.mxu0 0.0
        %1171 = vmatprep.subr.mxu0 0.0
        %1172 = vmatpush1.xpose.msra.mxu0 0.0
        %1173 = vmatprep.subr.mxu0 0.0
        %1174 = vmatpush1.xpose.msra.mxu0 0.0
        %1175 = vmatprep.subr.mxu0 0.0
        %1176 = vmatpush1.xpose.msra.mxu0 0.0
        %1177 = vmatprep.subr.mxu0 0.0
        %1178 = vmatpush1.xpose.msra.mxu0 0.0
        %1179 = vmatprep.subr.mxu0 0.0
        %1180 = vmatpush1.xpose.msra.mxu0 0.0
        %1181 = vmatprep.subr.mxu0 0.0
        %1182 = vmatpush1.xpose.msra.mxu0 0.0
        %1183 = vmatprep.subr.mxu0 0.0
        %1184 = vmatpush1.xpose.msra.mxu0 0.0
        %1185 = vmatprep.subr.mxu0 0.0
        %1186 = vmatpush1.xpose.msra.mxu0 0.0
        %1187 = vmatprep.subr.mxu0 0.0
        %1188 = vmatpush1.xpose.msra.mxu0 0.0
        %1189 = vmatprep.subr.mxu0 0.0
        %1190 = vmatpush1.xpose.msra.mxu0 0.0
        %1191 = vmatprep.subr.mxu0 0.0
        %1192 = vmatpush1.xpose.msra.mxu0 0.0
        %1193 = vmatprep.subr.mxu0 0.0
        %1194 = vmatpush1.xpose.msra.mxu0 0.0
        %1195 = vmatprep.subr.mxu0 0.0
        %1196 = vmatpush1.xpose.msra.mxu0 0.0
        %1197 = vmatprep.subr.mxu0 0.0
        %1198 = vmatpush1.xpose.msra.mxu0 0.0
        %1199 = vmatprep.subr.mxu0 0.0
        %1200 = vmatpush1.xpose.msra.mxu0 0.0
        %1201 = vmatprep.subr.mxu0 0.0
        %1202 = vmatpush1.xpose.msra.mxu0 0.0
        %1203 = vmatprep.subr.mxu0 0.0
        %1204 = vmatpush1.xpose.msra.mxu0 0.0
        %1205 = vmatprep.subr.mxu0 0.0
        %1206 = vmatpush1.xpose.msra.mxu0 0.0
        %1207 = vmatprep.mubr.f32.mxu0 0.0
        %1208 = vmatmul.mubr.f32.gmra.mrb[0].mxu0 %v1139
        %v1209 = vpop.f32.mrb[0].mxu0
        %v1210 = vadd.f32 0.0, %v1209
        %v1211 = vpop.f32.mrb[0].mxu0
        %1212 = vdwg.mxu0
        %v1213 = vsel %vm654, %v1210, -inf
        %1214 = vmax.xlane.f32.xlu0 %v1213
        %v1215 = vpop.xlane.xlu0 %1214
        %v1216 = vsub.f32 %v1210, %v1215
        %v1217 = vmul.f32 %v1216, 1.442695
        %v1218 = vpow.pop %v1217
        %v1219 = vsel %vm654, %v1218, 0.0
        %1220 = vadd.xlane.f32.xlu0 %v1219
        %v1221 = vpop.xlane.xlu0 %1220
        %v1222 = vrcp.pop %v1221
        %v1223 = vmul.f32 %v1221, %v1222
        %v1224 = vsub.f32 2.0, %v1223
        %v1225 = vmul.f32 %v1222, %v1224
        %v1226 = vmul.f32 %v1218, %v1225
        %1227 = vrot.lane.b32.xlu0 %v651, 112
        %v1228 = vpop.permute.xlu0 %1227
        %v1231 = vsel %vm654, %v1226, 0
        %1233 = vmatprep.subr.mxu0 0.0
        %1234 = vmatpush1.msra.mxu0 %v1228
        %1235 = vmatprep.subr.mxu0 0.0
        %1236 = vmatpush1.msra.mxu0 0.0
        %1237 = vmatprep.subr.mxu0 0.0
        %1238 = vmatpush1.msra.mxu0 0.0
        %1239 = vmatprep.subr.mxu0 0.0
        %1240 = vmatpush1.msra.mxu0 0.0
        %1241 = vmatprep.subr.mxu0 0.0
        %1242 = vmatpush1.msra.mxu0 0.0
        %1243 = vmatprep.subr.mxu0 0.0
        %1244 = vmatpush1.msra.mxu0 0.0
        %1245 = vmatprep.subr.mxu0 0.0
        %1246 = vmatpush1.msra.mxu0 0.0
        %1247 = vmatprep.subr.mxu0 0.0
        %1248 = vmatpush1.msra.mxu0 0.0
        %1249 = vmatprep.subr.mxu0 0.0
        %1250 = vmatpush1.msra.mxu0 0.0
        %1251 = vmatprep.subr.mxu0 0.0
        %1252 = vmatpush1.msra.mxu0 0.0
        %1253 = vmatprep.subr.mxu0 0.0
        %1254 = vmatpush1.msra.mxu0 0.0
        %1255 = vmatprep.subr.mxu0 0.0
        %1256 = vmatpush1.msra.mxu0 0.0
        %1257 = vmatprep.subr.mxu0 0.0
        %1258 = vmatpush1.msra.mxu0 0.0
        %1259 = vmatprep.subr.mxu0 0.0
        %1260 = vmatpush1.msra.mxu0 0.0
        %1261 = vmatprep.subr.mxu0 0.0
        %1262 = vmatpush1.msra.mxu0 0.0
        %1263 = vmatprep.subr.mxu0 0.0
        %1264 = vmatpush1.msra.mxu0 0.0
        %1265 = vmatprep.subr.mxu0 0.0
        %1266 = vmatpush1.msra.mxu0 0.0
        %1267 = vmatprep.subr.mxu0 0.0
        %1268 = vmatpush1.msra.mxu0 0.0
        %1269 = vmatprep.subr.mxu0 0.0
        %1270 = vmatpush1.msra.mxu0 0.0
        %1271 = vmatprep.subr.mxu0 0.0
        %1272 = vmatpush1.msra.mxu0 0.0
        %1273 = vmatprep.subr.mxu0 0.0
        %1274 = vmatpush1.msra.mxu0 0.0
        %1275 = vmatprep.subr.mxu0 0.0
        %1276 = vmatpush1.msra.mxu0 0.0
        %1277 = vmatprep.subr.mxu0 0.0
        %1278 = vmatpush1.msra.mxu0 0.0
        %1279 = vmatprep.subr.mxu0 0.0
        %1280 = vmatpush1.msra.mxu0 0.0
        %1281 = vmatprep.subr.mxu0 0.0
        %1282 = vmatpush1.msra.mxu0 0.0
        %1283 = vmatprep.subr.mxu0 0.0
        %1284 = vmatpush1.msra.mxu0 0.0
        %1285 = vmatprep.subr.mxu0 0.0
        %1286 = vmatpush1.msra.mxu0 0.0
        %1287 = vmatprep.subr.mxu0 0.0
        %1288 = vmatpush1.msra.mxu0 0.0
        %1289 = vmatprep.subr.mxu0 0.0
        %1290 = vmatpush1.msra.mxu0 0.0
        %1291 = vmatprep.subr.mxu0 0.0
        %1292 = vmatpush1.msra.mxu0 0.0
        %1293 = vmatprep.subr.mxu0 0.0
        %1294 = vmatpush1.msra.mxu0 0.0
        %1295 = vmatprep.subr.mxu0 0.0
        %1296 = vmatpush1.msra.mxu0 0.0
        %1297 = vmatprep.mubr.f32.mxu0 0.0
        %1298 = vmatmul.mubr.f32.gmra.mrb[0].mxu0 %v1231
        %v1299 = vpop.f32.mrb[0].mxu0
        %v1300 = vadd.f32 0.0, %v1299
        %v1301 = vpop.f32.mrb[0].mxu0
        %1302 = vdwg.mxu0
        %v1303 = vld [vmem:[#allocation10 + $0x10] sm:$0xff]
        %v1305 = vsel %vm654, %v1300, 0
        %1307 = vmatprep.subr.mxu0 0.0
        %1308 = vmatpush1.msra.mxu0 %v1303
        %1309 = vmatprep.subr.mxu0 0.0
        %1310 = vmatpush1.msra.mxu0 0.0
        %1311 = vmatprep.subr.mxu0 0.0
        %1312 = vmatpush1.msra.mxu0 0.0
        %1313 = vmatprep.subr.mxu0 0.0
        %1314 = vmatpush1.msra.mxu0 0.0
        %1315 = vmatprep.subr.mxu0 0.0
        %1316 = vmatpush1.msra.mxu0 0.0
        %1317 = vmatprep.subr.mxu0 0.0
        %1318 = vmatpush1.msra.mxu0 0.0
        %1319 = vmatprep.subr.mxu0 0.0
        %1320 = vmatpush1.msra.mxu0 0.0
        %1321 = vmatprep.subr.mxu0 0.0
        %1322 = vmatpush1.msra.mxu0 0.0
        %1323 = vmatprep.subr.mxu0 0.0
        %1324 = vmatpush1.msra.mxu0 0.0
        %1325 = vmatprep.subr.mxu0 0.0
        %1326 = vmatpush1.msra.mxu0 0.0
        %1327 = vmatprep.subr.mxu0 0.0
        %1328 = vmatpush1.msra.mxu0 0.0
        %1329 = vmatprep.subr.mxu0 0.0
        %1330 = vmatpush1.msra.mxu0 0.0
        %1331 = vmatprep.subr.mxu0 0.0
        %1332 = vmatpush1.msra.mxu0 0.0
        %1333 = vmatprep.subr.mxu0 0.0
        %1334 = vmatpush1.msra.mxu0 0.0
        %1335 = vmatprep.subr.mxu0 0.0
        %1336 = vmatpush1.msra.mxu0 0.0
        %1337 = vmatprep.subr.mxu0 0.0
        %1338 = vmatpush1.msra.mxu0 0.0
        %1339 = vmatprep.subr.mxu0 0.0
        %1340 = vmatpush1.msra.mxu0 0.0
        %1341 = vmatprep.subr.mxu0 0.0
        %1342 = vmatpush1.msra.mxu0 0.0
        %1343 = vmatprep.subr.mxu0 0.0
        %1344 = vmatpush1.msra.mxu0 0.0
        %1345 = vmatprep.subr.mxu0 0.0
        %1346 = vmatpush1.msra.mxu0 0.0
        %1347 = vmatprep.subr.mxu0 0.0
        %1348 = vmatpush1.msra.mxu0 0.0
        %1349 = vmatprep.subr.mxu0 0.0
        %1350 = vmatpush1.msra.mxu0 0.0
        %1351 = vmatprep.subr.mxu0 0.0
        %1352 = vmatpush1.msra.mxu0 0.0
        %1353 = vmatprep.subr.mxu0 0.0
        %1354 = vmatpush1.msra.mxu0 0.0
        %1355 = vmatprep.subr.mxu0 0.0
        %1356 = vmatpush1.msra.mxu0 0.0
        %1357 = vmatprep.subr.mxu0 0.0
        %1358 = vmatpush1.msra.mxu0 0.0
        %1359 = vmatprep.subr.mxu0 0.0
        %1360 = vmatpush1.msra.mxu0 0.0
        %1361 = vmatprep.subr.mxu0 0.0
        %1362 = vmatpush1.msra.mxu0 0.0
        %1363 = vmatprep.subr.mxu0 0.0
        %1364 = vmatpush1.msra.mxu0 0.0
        %1365 = vmatprep.subr.mxu0 0.0
        %1366 = vmatpush1.msra.mxu0 0.0
        %1367 = vmatprep.subr.mxu0 0.0
        %1368 = vmatpush1.msra.mxu0 0.0
        %1369 = vmatprep.subr.mxu0 0.0
        %1370 = vmatpush1.msra.mxu0 0.0
        %1371 = vmatprep.mubr.f32.mxu0 0.0
        %1372 = vmatmul.mubr.f32.gmra.mrb[0].mxu0 %v1305
        %v1373 = vpop.f32.mrb[0].mxu0
        %v1374 = vadd.f32 0.0, %v1373
        %v1375 = vpop.f32.mrb[0].mxu0
        %1376 = vdwg.mxu0
        %v1377 = vadd.f32 %v1132, %v1374
        %1378 = vrot.lane.b32.xlu0 %v479, 104
        %v1379 = vpop.permute.xlu0 %1378
        %1380 = vrot.lane.b32.xlu0 %v565, 104
        %v1381 = vpop.permute.xlu0 %1380
        %v1382 = vsel %vm654, %v1379, 0
        %v1384 = vsel %vm654, %v1381, 0
        %1386 = vmatprep.subr.mxu0 0.0
        %1387 = vmatpush1.xpose.msra.mxu0 %v1384
        %1388 = vmatprep.subr.mxu0 0.0
        %1389 = vmatpush1.xpose.msra.mxu0 0.0
        %1390 = vmatprep.subr.mxu0 0.0
        %1391 = vmatpush1.xpose.msra.mxu0 0.0
        %1392 = vmatprep.subr.mxu0 0.0
        %1393 = vmatpush1.xpose.msra.mxu0 0.0
        %1394 = vmatprep.subr.mxu0 0.0
        %1395 = vmatpush1.xpose.msra.mxu0 0.0
        %1396 = vmatprep.subr.mxu0 0.0
        %1397 = vmatpush1.xpose.msra.mxu0 0.0
        %1398 = vmatprep.subr.mxu0 0.0
        %1399 = vmatpush1.xpose.msra.mxu0 0.0
        %1400 = vmatprep.subr.mxu0 0.0
        %1401 = vmatpush1.xpose.msra.mxu0 0.0
        %1402 = vmatprep.subr.mxu0 0.0
        %1403 = vmatpush1.xpose.msra.mxu0 0.0
        %1404 = vmatprep.subr.mxu0 0.0
        %1405 = vmatpush1.xpose.msra.mxu0 0.0
        %1406 = vmatprep.subr.mxu0 0.0
        %1407 = vmatpush1.xpose.msra.mxu0 0.0
        %1408 = vmatprep.subr.mxu0 0.0
        %1409 = vmatpush1.xpose.msra.mxu0 0.0
        %1410 = vmatprep.subr.mxu0 0.0
        %1411 = vmatpush1.xpose.msra.mxu0 0.0
        %1412 = vmatprep.subr.mxu0 0.0
        %1413 = vmatpush1.xpose.msra.mxu0 0.0
        %1414 = vmatprep.subr.mxu0 0.0
        %1415 = vmatpush1.xpose.msra.mxu0 0.0
        %1416 = vmatprep.subr.mxu0 0.0
        %1417 = vmatpush1.xpose.msra.mxu0 0.0
        %1418 = vmatprep.subr.mxu0 0.0
        %1419 = vmatpush1.xpose.msra.mxu0 0.0
        %1420 = vmatprep.subr.mxu0 0.0
        %1421 = vmatpush1.xpose.msra.mxu0 0.0
        %1422 = vmatprep.subr.mxu0 0.0
        %1423 = vmatpush1.xpose.msra.mxu0 0.0
        %1424 = vmatprep.subr.mxu0 0.0
        %1425 = vmatpush1.xpose.msra.mxu0 0.0
        %1426 = vmatprep.subr.mxu0 0.0
        %1427 = vmatpush1.xpose.msra.mxu0 0.0
        %1428 = vmatprep.subr.mxu0 0.0
        %1429 = vmatpush1.xpose.msra.mxu0 0.0
        %1430 = vmatprep.subr.mxu0 0.0
        %1431 = vmatpush1.xpose.msra.mxu0 0.0
        %1432 = vmatprep.subr.mxu0 0.0
        %1433 = vmatpush1.xpose.msra.mxu0 0.0
        %1434 = vmatprep.subr.mxu0 0.0
        %1435 = vmatpush1.xpose.msra.mxu0 0.0
        %1436 = vmatprep.subr.mxu0 0.0
        %1437 = vmatpush1.xpose.msra.mxu0 0.0
        %1438 = vmatprep.subr.mxu0 0.0
        %1439 = vmatpush1.xpose.msra.mxu0 0.0
        %1440 = vmatprep.subr.mxu0 0.0
        %1441 = vmatpush1.xpose.msra.mxu0 0.0
        %1442 = vmatprep.subr.mxu0 0.0
        %1443 = vmatpush1.xpose.msra.mxu0 0.0
        %1444 = vmatprep.subr.mxu0 0.0
        %1445 = vmatpush1.xpose.msra.mxu0 0.0
        %1446 = vmatprep.subr.mxu0 0.0
        %1447 = vmatpush1.xpose.msra.mxu0 0.0
        %1448 = vmatprep.subr.mxu0 0.0
        %1449 = vmatpush1.xpose.msra.mxu0 0.0
        %1450 = vmatprep.mubr.f32.mxu0 0.0
        %1451 = vmatmul.mubr.f32.gmra.mrb[0].mxu0 %v1382
        %v1452 = vpop.f32.mrb[0].mxu0
        %v1453 = vadd.f32 0.0, %v1452
        %v1454 = vpop.f32.mrb[0].mxu0
        %1455 = vdwg.mxu0
        %v1456 = vsel %vm654, %v1453, -inf
        %1457 = vmax.xlane.f32.xlu0 %v1456
        %v1458 = vpop.xlane.xlu0 %1457
        %v1459 = vsub.f32 %v1453, %v1458
        %v1460 = vmul.f32 %v1459, 1.442695
        %v1461 = vpow.pop %v1460
        %v1462 = vsel %vm654, %v1461, 0.0
        %1463 = vadd.xlane.f32.xlu0 %v1462
        %v1464 = vpop.xlane.xlu0 %1463
        %v1465 = vrcp.pop %v1464
        %v1466 = vmul.f32 %v1464, %v1465
        %v1467 = vsub.f32 2.0, %v1466
        %v1468 = vmul.f32 %v1465, %v1467
        %v1469 = vmul.f32 %v1461, %v1468
        %1470 = vrot.lane.b32.xlu0 %v651, 104
        %v1471 = vpop.permute.xlu0 %1470
        %v1474 = vsel %vm654, %v1469, 0
        %1476 = vmatprep.subr.mxu0 0.0
        %1477 = vmatpush1.msra.mxu0 %v1471
        %1478 = vmatprep.subr.mxu0 0.0
        %1479 = vmatpush1.msra.mxu0 0.0
        %1480 = vmatprep.subr.mxu0 0.0
        %1481 = vmatpush1.msra.mxu0 0.0
        %1482 = vmatprep.subr.mxu0 0.0
        %1483 = vmatpush1.msra.mxu0 0.0
        %1484 = vmatprep.subr.mxu0 0.0
        %1485 = vmatpush1.msra.mxu0 0.0
        %1486 = vmatprep.subr.mxu0 0.0
        %1487 = vmatpush1.msra.mxu0 0.0
        %1488 = vmatprep.subr.mxu0 0.0
        %1489 = vmatpush1.msra.mxu0 0.0
        %1490 = vmatprep.subr.mxu0 0.0
        %1491 = vmatpush1.msra.mxu0 0.0
        %1492 = vmatprep.subr.mxu0 0.0
        %1493 = vmatpush1.msra.mxu0 0.0
        %1494 = vmatprep.subr.mxu0 0.0
        %1495 = vmatpush1.msra.mxu0 0.0
        %1496 = vmatprep.subr.mxu0 0.0
        %1497 = vmatpush1.msra.mxu0 0.0
        %1498 = vmatprep.subr.mxu0 0.0
        %1499 = vmatpush1.msra.mxu0 0.0
        %1500 = vmatprep.subr.mxu0 0.0
        %1501 = vmatpush1.msra.mxu0 0.0
        %1502 = vmatprep.subr.mxu0 0.0
        %1503 = vmatpush1.msra.mxu0 0.0
        %1504 = vmatprep.subr.mxu0 0.0
        %1505 = vmatpush1.msra.mxu0 0.0
        %1506 = vmatprep.subr.mxu0 0.0
        %1507 = vmatpush1.msra.mxu0 0.0
        %1508 = vmatprep.subr.mxu0 0.0
        %1509 = vmatpush1.msra.mxu0 0.0
        %1510 = vmatprep.subr.mxu0 0.0
        %1511 = vmatpush1.msra.mxu0 0.0
        %1512 = vmatprep.subr.mxu0 0.0
        %1513 = vmatpush1.msra.mxu0 0.0
        %1514 = vmatprep.subr.mxu0 0.0
        %1515 = vmatpush1.msra.mxu0 0.0
        %1516 = vmatprep.subr.mxu0 0.0
        %1517 = vmatpush1.msra.mxu0 0.0
        %1518 = vmatprep.subr.mxu0 0.0
        %1519 = vmatpush1.msra.mxu0 0.0
        %1520 = vmatprep.subr.mxu0 0.0
        %1521 = vmatpush1.msra.mxu0 0.0
        %1522 = vmatprep.subr.mxu0 0.0
        %1523 = vmatpush1.msra.mxu0 0.0
        %1524 = vmatprep.subr.mxu0 0.0
        %1525 = vmatpush1.msra.mxu0 0.0
        %1526 = vmatprep.subr.mxu0 0.0
        %1527 = vmatpush1.msra.mxu0 0.0
        %1528 = vmatprep.subr.mxu0 0.0
        %1529 = vmatpush1.msra.mxu0 0.0
        %1530 = vmatprep.subr.mxu0 0.0
        %1531 = vmatpush1.msra.mxu0 0.0
        %1532 = vmatprep.subr.mxu0 0.0
        %1533 = vmatpush1.msra.mxu0 0.0
        %1534 = vmatprep.subr.mxu0 0.0
        %1535 = vmatpush1.msra.mxu0 0.0
        %1536 = vmatprep.subr.mxu0 0.0
        %1537 = vmatpush1.msra.mxu0 0.0
        %1538 = vmatprep.subr.mxu0 0.0
        %1539 = vmatpush1.msra.mxu0 0.0
        %1540 = vmatprep.mubr.f32.mxu0 0.0
        %1541 = vmatmul.mubr.f32.gmra.mrb[0].mxu0 %v1474
        %v1542 = vpop.f32.mrb[0].mxu0
        %v1543 = vadd.f32 0.0, %v1542
        %v1544 = vpop.f32.mrb[0].mxu0
        %1545 = vdwg.mxu0
        %v1546 = vld [vmem:[#allocation10 + $0x18] sm:$0xff]
        %v1548 = vsel %vm654, %v1543, 0
        %1550 = vmatprep.subr.mxu0 0.0
        %1551 = vmatpush1.msra.mxu0 %v1546
        %1552 = vmatprep.subr.mxu0 0.0
        %1553 = vmatpush1.msra.mxu0 0.0
        %1554 = vmatprep.subr.mxu0 0.0
        %1555 = vmatpush1.msra.mxu0 0.0
        %1556 = vmatprep.subr.mxu0 0.0
        %1557 = vmatpush1.msra.mxu0 0.0
        %1558 = vmatprep.subr.mxu0 0.0
        %1559 = vmatpush1.msra.mxu0 0.0
        %1560 = vmatprep.subr.mxu0 0.0
        %1561 = vmatpush1.msra.mxu0 0.0
        %1562 = vmatprep.subr.mxu0 0.0
        %1563 = vmatpush1.msra.mxu0 0.0
        %1564 = vmatprep.subr.mxu0 0.0
        %1565 = vmatpush1.msra.mxu0 0.0
        %1566 = vmatprep.subr.mxu0 0.0
        %1567 = vmatpush1.msra.mxu0 0.0
        %1568 = vmatprep.subr.mxu0 0.0
        %1569 = vmatpush1.msra.mxu0 0.0
        %1570 = vmatprep.subr.mxu0 0.0
        %1571 = vmatpush1.msra.mxu0 0.0
        %1572 = vmatprep.subr.mxu0 0.0
        %1573 = vmatpush1.msra.mxu0 0.0
        %1574 = vmatprep.subr.mxu0 0.0
        %1575 = vmatpush1.msra.mxu0 0.0
        %1576 = vmatprep.subr.mxu0 0.0
        %1577 = vmatpush1.msra.mxu0 0.0
        %1578 = vmatprep.subr.mxu0 0.0
        %1579 = vmatpush1.msra.mxu0 0.0
        %1580 = vmatprep.subr.mxu0 0.0
        %1581 = vmatpush1.msra.mxu0 0.0
        %1582 = vmatprep.subr.mxu0 0.0
        %1583 = vmatpush1.msra.mxu0 0.0
        %1584 = vmatprep.subr.mxu0 0.0
        %1585 = vmatpush1.msra.mxu0 0.0
        %1586 = vmatprep.subr.mxu0 0.0
        %1587 = vmatpush1.msra.mxu0 0.0
        %1588 = vmatprep.subr.mxu0 0.0
        %1589 = vmatpush1.msra.mxu0 0.0
        %1590 = vmatprep.subr.mxu0 0.0
        %1591 = vmatpush1.msra.mxu0 0.0
        %1592 = vmatprep.subr.mxu0 0.0
        %1593 = vmatpush1.msra.mxu0 0.0
        %1594 = vmatprep.subr.mxu0 0.0
        %1595 = vmatpush1.msra.mxu0 0.0
        %1596 = vmatprep.subr.mxu0 0.0
        %1597 = vmatpush1.msra.mxu0 0.0
        %1598 = vmatprep.subr.mxu0 0.0
        %1599 = vmatpush1.msra.mxu0 0.0
        %1600 = vmatprep.subr.mxu0 0.0
        %1601 = vmatpush1.msra.mxu0 0.0
        %1602 = vmatprep.subr.mxu0 0.0
        %1603 = vmatpush1.msra.mxu0 0.0
        %1604 = vmatprep.subr.mxu0 0.0
        %1605 = vmatpush1.msra.mxu0 0.0
        %1606 = vmatprep.subr.mxu0 0.0
        %1607 = vmatpush1.msra.mxu0 0.0
        %1608 = vmatprep.subr.mxu0 0.0
        %1609 = vmatpush1.msra.mxu0 0.0
        %1610 = vmatprep.subr.mxu0 0.0
        %1611 = vmatpush1.msra.mxu0 0.0
        %1612 = vmatprep.subr.mxu0 0.0
        %1613 = vmatpush1.msra.mxu0 0.0
        %1614 = vmatprep.mubr.f32.mxu0 0.0
        %1615 = vmatmul.mubr.f32.gmra.mrb[0].mxu0 %v1548
        %v1616 = vpop.f32.mrb[0].mxu0
        %v1617 = vadd.f32 0.0, %v1616
        %v1618 = vpop.f32.mrb[0].mxu0
        %1619 = vdwg.mxu0
        %v1620 = vadd.f32 %v1377, %v1617
        %v1621 = vld [vmem:[%s6] sm:$0x1]
        %v1623 = vlaneseq
        %v1624 = vshrl.u32 %v1623, 7
        %v1625 = vsub.s32 0, %v1624
        %v1626 = vrot.slane %v1621, %v1625
        %v1628 = vadd.f32 %v1620, %v1626
        %1629 = vst.msk [vmem:[%s393] sm:$0xff] %vm408, %v1628
        %s1630 = sand.u32 %s198, 1
        %s1631 = scalar_lea.sflag [#allocation4], %s1630
        %s1632 = sand.u32 %s198, 1
        %s1633 = smul.addr %s1632, 8
        %s1634 = scalar_lea.vmem [#allocation11], %s1633
        // Predicated region
        $region69: #{tpu_custom_call.1} parent=47 // pred_check
          %p1635 = pneg %p208
        $region70: #{tpu_custom_call.1} parent=47 // pred_check_branch
          %1637 = sbr.rel (%p1635) target = $region72
        $region71: #{tpu_custom_call.1} parent=47 // pred_region
          %s1639 = ssub.s32 128, 128
          %1640 = vsyncadd %s1631, %s1639
          %s1641 = smul.addr %s28, 128
          %s1642 = scalar_lea.hbm %s7, %s1641
          %s1644 = sshll.u32 %s1634, 4
          %s1645 = int_to_ptr.vmem [resolvable:$true] %s1644
          %1647 = dma.vmem_to_hbm [thread:$0]  %s1645, 128, %s1642, %s1631
        $region72: #{tpu_custom_call.1} parent=47 // pred_fallthru
          _
      $region48: #{tpu_custom_call.1} parent=5 // pred_fallthru
        _
      %p1648 = scmp.le.s32.totalorder 2, %s23
      // Predicated region
      $region73: #{tpu_custom_call.1} parent=5 // pred_check
        %p1649 = pneg %p1648
      $region74: #{tpu_custom_call.1} parent=5 // pred_check_branch
        %1651 = sbr.rel (%p1649) target = $region76
      $region75: #{tpu_custom_call.1} parent=5 // pred_region
        %s1652 = ssub.s32 %s23, 2
        // Predicated region
        $region77: #{tpu_custom_call.1} parent=75 // pred_check
          %p1653 = pneg %p214
        $region78: #{tpu_custom_call.1} parent=75 // pred_check_branch
          %1655 = sbr.rel (%p1653) target = $region80
        $region79: #{tpu_custom_call.1} parent=75 // pred_region
          %s1656 = sand.u32 %s199, 1
          %s1657 = scalar_lea.sflag [#allocation4], %s1656
          %s1658 = sand.u32 %s199, 1
          %s1659 = smul.addr %s1658, 8
          %s1660 = scalar_lea.vmem [#allocation11], %s1659
          %1661 = dma.done %s1657, 128
        $region80: #{tpu_custom_call.1} parent=75 // pred_fallthru
          _
      $region76: #{tpu_custom_call.1} parent=5 // pred_fallthru
        _
    $region6: #{tpu_custom_call.1} parent=1 // loop_footer
      %s27 = sadd.s32 1, %s23
    $region7: #{tpu_custom_call.1} parent=1 // loop_footer_branch
      %22 = sbr.rel target = $region3
    $region8: #{tpu_custom_call.1} parent=1 // loop_exit
      _
    %1662 = vsyncpa [#allocation3], 1
    %s1663 = scalar_lea.sflag [#allocation3], 1
    %1664 = vsyncpa %s1663, 1
    %1665 = vsyncpa [#allocation6], 1
    %s1666 = scalar_lea.sflag [#allocation6], 1
    %1667 = vsyncpa %s1666, 1
    %1668 = vsyncpa [#allocation9], 1
    %1669 = vsyncpa [#allocation4], 1
    %s1670 = scalar_lea.sflag [#allocation4], 1
    %1671 = vsyncpa %s1670, 1

</llo_original>
